<compile_context>
chip_gen: v7x
topology: tpu7x:2x2x1
jax: 0.10.0
libtpu: 0.0.40
codegen_flags: <defaults>
</compile_context>

<pallas_src>
import math

import numpy as np

import jax
import jax.numpy as jnp
from jax.experimental import pallas as pl
from jax.experimental.pallas import tpu as pltpu


# ---------------------------------------------------------------------------
# Pallas kernel: the whole network in one call.
# ---------------------------------------------------------------------------
def _make_fused_kernel(cfg):
    n = cfg["batch"]
    layer_meta = cfg["layers"]
    n_groups = cfg["n_groups"]
    h_f, w_f, c_f = cfg["h_f"], cfg["w_f"], cfg["c_f"]
    rows_buf = cfg["rows_max"] + 2       # +2 rows so offset-1 data layout has
    cols_buf = cfg["cols_max"]           # room for the +/-1 row slices.

    def kernel(*refs):
        x_ref = refs[0]
        b_refs = [refs[1 + 2 * g] for g in range(n_groups)]   # stacked bf16 B
        s_refs = [refs[2 + 2 * g] for g in range(n_groups)]   # stacked f32 shift
        fcmat_ref = refs[1 + 2 * n_groups]                    # (Cf*Wf, Kpad) bf16
        fcb_ref = refs[2 + 2 * n_groups]                      # (1, Kpad) f32
        out_ref = refs[3 + 2 * n_groups]                      # (N, Kpad) f32
        buf0 = refs[4 + 2 * n_groups]                         # ping-pong VMEM
        buf1 = refs[5 + 2 * n_groups]

        # Zero the ping-pong buffers once (boundary rows are additionally
        # masked with jnp.where, this is just belt-and-braces).
        zero = jnp.zeros((rows_buf, cols_buf), jnp.float32)
        buf0[...] = zero
        buf1[...] = zero

        # Stage the packed (N*H0, C0*W0) input at row offset 1 of buf0.
        lm0 = layer_meta[0]
        rows0 = n * lm0["h_in"]
        cols0 = lm0["cin"] * lm0["w_in"]
        buf0[1:rows0 + 1, 0:cols0] = x_ref[...]

        src, dst = buf0, buf1
        for lm in layer_meta:                       # statically unrolled
            rows_in = n * lm["h_in"]
            cols_in = lm["cin"] * lm["w_in"]
            rows_out = n * lm["h_out"]
            cols_out = lm["cout"] * lm["w_out"]

            if lm["stride"] == 1:
                # Kernel rows kh=0/1/2 are the activation shifted by -1/0/+1
                # rows; rows whose source crosses an image boundary within the
                # packed (N*H) row dim are zeroed via an iota mask.
                rid = jax.lax.broadcasted_iota(jnp.int32,
                                               (rows_out, cols_in), 0)
                lh = rid % lm["h_in"]
                r1 = src[1:rows_in + 1, 0:cols_in]
                r0 = jnp.where(lh == 0, 0.0, src[0:rows_in, 0:cols_in])
                r2 = jnp.where(lh == lm["h_in"] - 1, 0.0,
                               src[2:rows_in + 2, 0:cols_in])
            else:
                # stride 2 (H even): even/odd input rows via strided loads;
                # kh=0 needs row 2*ho-1, which is the odd rows shifted by one
                # output row -> realized as a stride-2 load starting at 0 with
                # the ho==0 rows (image top, incl. batch boundary) masked.
                rid = jax.lax.broadcasted_iota(jnp.int32,
                                               (rows_out, cols_in), 0)
                lho = rid % lm["h_out"]
                r1 = src[pl.ds(1, rows_out, stride=2), 0:cols_in]   # h = 2*ho
                r2 = src[pl.ds(2, rows_out, stride=2), 0:cols_in]   # h = 2*ho+1
                r0 = jnp.where(lho == 0, 0.0,
                               src[pl.ds(0, rows_out, stride=2), 0:cols_in])

            # One deep bf16 MXU matmul per layer (kh fused along contraction).
            stacked = jnp.concatenate([r0.astype(jnp.bfloat16),
                                       r1.astype(jnp.bfloat16),
                                       r2.astype(jnp.bfloat16)], axis=1)
            b = b_refs[lm["group"]][lm["idx"]]        # (3*Cin*Win, Cout*Wo)
            shift = s_refs[lm["group"]][lm["idx"]]    # (1, Cout*Wo) f32
            pre = jnp.dot(stacked, b, preferred_element_type=jnp.float32)
            act = jnp.maximum(pre + shift, 0.0)       # BN shift + ReLU (f32)
            dst[1:rows_out + 1, 0:cols_out] = act
            src, dst = dst, src

        # Global average pool: sum over h with strided row loads; the 1/(H*W)
        # factor and the w-sum are folded into fcmat host-side.
        cols_f = c_f * w_f
        pooled = src[pl.ds(1, n, stride=h_f), 0:cols_f]
        for hh in range(1, h_f):
            pooled = pooled + src[pl.ds(1 + hh, n, stride=h_f), 0:cols_f]
        logits = jnp.dot(pooled.astype(jnp.bfloat16), fcmat_ref[...],
                         preferred_element_type=jnp.float32) + fcb_ref[...]
        out_ref[...] = logits

    return kernel


# ---------------------------------------------------------------------------
# Host-side one-time packing: fold conv weights, inference-mode BN, padding,
# stride (column side), avg-pool and Linear into a few stacked constants.
# ---------------------------------------------------------------------------
def _col_select(w_out, w_in, stride, kw):
    """T[w, wo] = 1 iff w == stride*wo + kw - 1 (3x3 conv, padding=1)."""
    sel = np.zeros((w_in, w_out), np.float32)
    for wo in range(w_out):
        w = stride * wo + kw - 1
        if 0 <= w < w_in:
            sel[w, wo] = 1.0
    return sel


def prepare_pallas_params(params, batch, height, width, eps=1e-5):
    convs = [np.asarray(c, np.float32) for c in params["convs"]]
    bns = params["bns"]
    strides = params["strides"]

    # Zero-pad the first conv's input channels so Cin*W is a multiple of 128
    # (lane-aligned concats/matmuls; also makes every layer's B shape equal so
    # all layers stack into one operand).
    cin0 = convs[0].shape[1]
    cin0_pad = cin0
    for extra in range(0, 129):
        if ((cin0 + extra) * width) % 128 == 0:
            cin0_pad = cin0 + extra
            break
    if cin0_pad != cin0:
        convs[0] = np.concatenate(
            [convs[0],
             np.zeros((convs[0].shape[0], cin0_pad - cin0, 3, 3), np.float32)],
            axis=1)

    layer_meta, b_np, s_np = [], [], []
    h, w = height, width
    for wt, bn, stride in zip(convs, bns, strides):
        cout, cin = wt.shape[0], wt.shape[1]
        gamma = np.asarray(bn["gamma"], np.float32)
        beta = np.asarray(bn["beta"], np.float32)
        mean = np.asarray(bn["mean"], np.float32)
        var = np.asarray(bn["var"], np.float32)
        scale = gamma / np.sqrt(var + eps)
        shift = beta - mean * scale
        wts = wt * scale[:, None, None, None]          # fold BN scale
        if stride == 2:
            assert h % 2 == 0 and w % 2 == 0, "stride-2 layers need even H, W"
        h_out = (h - 1) // stride + 1
        w_out = (w - 1) // stride + 1
        tsel = np.stack([_col_select(w_out, w, stride, kw) for kw in range(3)])
        # B[kh*Cin*Win + ci*Win + w, co*Wo + wo] = sum_kw wt*col_select
        b = np.einsum("oihk,kwv->hiwov", wts, tsel).reshape(
            3 * cin * w, cout * w_out)
        s_row = np.repeat(shift, w_out)[None, :].astype(np.float32)
        layer_meta.append(dict(stride=stride, h_in=h, w_in=w, cin=cin,
                               h_out=h_out, w_out=w_out, cout=cout))
        b_np.append(np.ascontiguousarray(b, np.float32))
        s_np.append(s_row)
        h, w = h_out, w_out

    # Group consecutive layers with identical B shapes into stacked operands
    # (few large DMAs instead of ~3 per layer).
    groups = []
    for i, b in enumerate(b_np):
        if groups and groups[-1]["shape"] == b.shape:
            groups[-1]["ids"].append(i)
        else:
            groups.append(dict(shape=b.shape, ids=[i]))
    operands = []
    for g_idx, g in enumerate(groups):
        for j, i in enumerate(g["ids"]):
            layer_meta[i]["group"] = g_idx
            layer_meta[i]["idx"] = j
        operands.append(
            jnp.asarray(np.stack([b_np[i] for i in g["ids"]])).astype(
                jnp.bfloat16))
        operands.append(jnp.asarray(np.stack([s_np[i] for i in g["ids"]])))

    c_f, h_f, w_f = layer_meta[-1]["cout"], h, w
    fc_w = np.asarray(params["fc_w"], np.float32)      # (K, Cf)
    fc_b = np.asarray(params["fc_b"], np.float32)      # (K,)
    k = fc_w.shape[0]
    k_pad = ((k + 127) // 128) * 128                   # lane-dense output
    fcmat = np.zeros((c_f * w_f, k_pad), np.float32)
    fcmat[:, :k] = np.repeat(fc_w.T, w_f, axis=0) / float(w_f * h_f)
    fcb = np.zeros((1, k_pad), np.float32)
    fcb[0, :k] = fc_b
    operands.append(jnp.asarray(fcmat).astype(jnp.bfloat16))
    operands.append(jnp.asarray(fcb))

    cfg = dict(
        batch=batch, height=height, width=width,
        cin0=cin0, cin0_pad=cin0_pad,
        layers=layer_meta, n_groups=len(groups),
        c_f=c_f, h_f=h_f, w_f=w_f,
        num_classes=k, k_pad=k_pad,
        rows_max=batch * height,
        cols_max=max(max(m["cin"] * m["w_in"], m["cout"] * m["w_out"])
                     for m in layer_meta),
    )
    return cfg, tuple(operands)


def make_forward(cfg, operands):
    kernel = _make_fused_kernel(cfg)
    n = cfg["batch"]
    k, k_pad = cfg["num_classes"], cfg["k_pad"]
    rows_buf = cfg["rows_max"] + 2
    cols_buf = cfg["cols_max"]
    n_inputs = 1 + len(operands)

    # Cost estimate + derived VMEM budget (everything is resident once; 4x the
    # actual footprint + 4 MiB covers compiler temporaries, still << 64 MiB).
    flops = 0
    for m in cfg["layers"]:
        flops += 2 * (n * m["h_out"]) * (3 * m["cin"] * m["w_in"]) * \
                 (m["cout"] * m["w_out"])
    flops += 2 * n * (cfg["c_f"] * cfg["w_f"]) * k_pad
    a0_bytes = n * cfg["height"] * cfg["cin0_pad"] * cfg["width"] * 4
    out_bytes = n * k_pad * 4
    op_bytes = sum(int(np.prod(o.shape)) * o.dtype.itemsize for o in operands)
    scratch_bytes = 2 * rows_buf * cols_buf * 4
    total_bytes = a0_bytes + out_bytes + op_bytes + scratch_bytes
    vmem_limit = int(4 * total_bytes + (4 << 20))

    call = pl.pallas_call(
        kernel,
        out_shape=jax.ShapeDtypeStruct((n, k_pad), jnp.float32),
        in_specs=[pl.BlockSpec(memory_space=pltpu.MemorySpace.VMEM)] * n_inputs,
        out_specs=pl.BlockSpec(memory_space=pltpu.MemorySpace.VMEM),
        scratch_shapes=[pltpu.VMEM((rows_buf, cols_buf), jnp.float32),
                        pltpu.VMEM((rows_buf, cols_buf), jnp.float32)],
        compiler_params=pltpu.CompilerParams(vmem_limit_bytes=vmem_limit),
        cost_estimate=pl.CostEstimate(flops=int(flops), transcendentals=0,
                                      bytes_accessed=int(total_bytes)),
    )
    # TODO(synk): at realistic batches add a batch-tiled grid axis with
    # dimension_semantics=("parallel",) so v7x's two TensorCores both work;
    # at N=2 a single grid step is optimal.

    @jax.jit
    def forward(ops, x_nchw):
        nb, c, hh, ww = x_nchw.shape
        x = x_nchw.astype(jnp.float32)
        pad_c = cfg["cin0_pad"] - c
        if pad_c > 0:
            x = jnp.pad(x, ((0, 0), (0, pad_c), (0, 0), (0, 0)))
        a0 = jnp.transpose(x, (0, 2, 1, 3)).reshape(
            nb * hh, cfg["cin0_pad"] * ww)
        out = call(a0, *ops)
        return out[:, :k]

    return forward


# ---------------------------------------------------------------------------
# Pure-JAX reference (lax.conv) for the correctness check.
# ---------------------------------------------------------------------------
def reference_forward(params, x, eps=1e-5):
    a = x.astype(jnp.float32)
    for wt, bn, s in zip(params["convs"], params["bns"], params["strides"]):
        a = jax.lax.conv_general_dilated(
            a, wt, window_strides=(s, s), padding=((1, 1), (1, 1)),
            dimension_numbers=("NCHW", "OIHW", "NCHW"),
            precision=jax.lax.Precision.HIGHEST)
        scale = bn["gamma"] / jnp.sqrt(bn["var"] + eps)
        shift = bn["beta"] - bn["mean"] * scale
        a = a * scale[None, :, None, None] + shift[None, :, None, None]
        a = jnp.maximum(a, 0.0)
    pooled = jnp.mean(a, axis=(2, 3))
    return (jnp.dot(pooled, params["fc_w"].T,
                    precision=jax.lax.Precision.HIGHEST)
            + params["fc_b"][None, :])


# ---------------------------------------------------------------------------
# Parameter construction (mirrors CNNReLU.__init__/initialize; BN uses its
# initial running stats -> inference-mode BN).
# ---------------------------------------------------------------------------
def make_params(key, layer_size, num_classes=10, input_features=16):
    params = {"convs": [], "bns": []}

    def add_conv(k, cin, cout):
        nfan = 3 * 3 * cout
        std = math.sqrt(2.0 / nfan)
        wt = jax.random.normal(k, (cout, cin, 3, 3), jnp.float32) * std
        params["convs"].append(wt)
        params["bns"].append(dict(
            gamma=jnp.ones((cout,), jnp.float32),
            beta=jnp.zeros((cout,), jnp.float32),
            mean=jnp.zeros((cout,), jnp.float32),
            var=jnp.ones((cout,), jnp.float32),
        ))

    specs = [(3, input_features, 1)]                                 # conv1/bn1
    specs += [(input_features, input_features, 1)] * layer_size      # layer1
    specs += [(input_features, 2 * input_features, 2)]               # layer2 ds
    specs += [(2 * input_features, 2 * input_features, 1)] * (layer_size - 1)
    specs += [(2 * input_features, 4 * input_features, 2)]           # layer3 ds
    specs += [(4 * input_features, 4 * input_features, 1)] * (layer_size - 1)

    keys = jax.random.split(key, len(specs) + 2)
    for k, (cin, cout, _) in zip(keys[:len(specs)], specs):
        add_conv(k, cin, cout)
    params["strides"] = [s for (_, _, s) in specs]

    fin = 4 * input_features
    fc_std = math.sqrt(2.0 / (fin * num_classes))
    params["fc_w"] = jax.random.normal(keys[-2], (num_classes, fin),
                                       jnp.float32) * fc_std
    bound = 1.0 / math.sqrt(fin)
    params["fc_b"] = jax.random.uniform(keys[-1], (num_classes,), jnp.float32,
                                        minval=-bound, maxval=bound)
    return params


# ---------------------------------------------------------------------------
if __name__ == "__main__":
    key = jax.random.PRNGKey(0)
    k_param, k_input = jax.random.split(key)

    LAYER_SIZE = 2
    NUM_CLASSES = 10
    INPUT_FEATURES = 8      # keeps every layer's Cin*W lane-aligned (=128)
    BATCH, HEIGHT, WIDTH = 2, 16, 16

    params = make_params(k_param, LAYER_SIZE, NUM_CLASSES, INPUT_FEATURES)
    x = jax.random.normal(k_input, (BATCH, 3, HEIGHT, WIDTH), jnp.float32)

    cfg, operands = prepare_pallas_params(params, BATCH, HEIGHT, WIDTH)
    forward = make_forward(cfg, operands)

    out = forward(operands, x)
    out = jax.block_until_ready(out)

    ref = jax.block_until_ready(reference_forward(params, x))

    assert out.shape == (BATCH, NUM_CLASSES)
    assert bool(jnp.all(jnp.isfinite(out)))
    # bf16 MXU operands, f32 accumulation -> loose-but-meaningful tolerance.
    np.testing.assert_allclose(np.asarray(out), np.asarray(ref),
                               rtol=5e-2, atol=5e-2)
    print("KERNEL_OK")
</pallas_src>

<mosaic_0001>
module attributes {stable_mosaic.version = 11 : i64} {
  func.func @kernel(%arg0: memref<32x128xf32, #tpu.memory_space<vmem>>, %arg1: memref<7x384x128xbf16, #tpu.memory_space<vmem>>, %arg2: memref<7x1x128xf32, #tpu.memory_space<vmem>>, %arg3: memref<128x128xbf16, #tpu.memory_space<vmem>>, %arg4: memref<1x128xf32, #tpu.memory_space<vmem>>, %arg5: memref<2x128xf32, #tpu.memory_space<vmem>>, %arg6: memref<34x128xf32, #tpu.memory_space<vmem>>, %arg7: memref<34x128xf32, #tpu.memory_space<vmem>>) attributes {dimension_semantics = [], scalar_prefetch = 0 : i64, scratch_operands = 2 : i64, tpu.core_type = #tpu.core_type<tc>} {
    %cst = arith.constant 0.000000e+00 : f32
    %0 = vector.broadcast %cst : f32 to vector<34x128xf32>
    %c0 = arith.constant 0 : index
    %c0_0 = arith.constant 0 : index
    %1 = vector.load %arg6[%c0, %c0_0] : memref<34x128xf32, #tpu.memory_space<vmem>>, vector<34x128xf32>
    tpu.vector_store %arg6[%c0, %c0_0], %0 {strides = array<i32>} : memref<34x128xf32, #tpu.memory_space<vmem>>, vector<34x128xf32>,
    %c0_1 = arith.constant 0 : index
    %c0_2 = arith.constant 0 : index
    %2 = vector.load %arg7[%c0_1, %c0_2] : memref<34x128xf32, #tpu.memory_space<vmem>>, vector<34x128xf32>
    tpu.vector_store %arg7[%c0_1, %c0_2], %0 {strides = array<i32>} : memref<34x128xf32, #tpu.memory_space<vmem>>, vector<34x128xf32>,
    %c0_3 = arith.constant 0 : index
    %c0_4 = arith.constant 0 : index
    %3 = vector.load %arg0[%c0_3, %c0_4] : memref<32x128xf32, #tpu.memory_space<vmem>>, vector<32x128xf32>
    %c1 = arith.constant 1 : index
    %c0_5 = arith.constant 0 : index
    %4 = vector.load %arg6[%c1, %c0_5] : memref<34x128xf32, #tpu.memory_space<vmem>>, vector<32x128xf32>
    tpu.vector_store %arg6[%c1, %c0_5], %3 {strides = array<i32>} : memref<34x128xf32, #tpu.memory_space<vmem>>, vector<32x128xf32>,
    %5 = tpu.iota {dimensions = array<i32: 0>} : vector<32x128xi32>
    %c16_i32 = arith.constant 16 : i32
    %c0_i32 = arith.constant 0 : i32
    %6 = arith.cmpi eq, %c16_i32, %c0_i32 : i32
    %c1_i32 = arith.constant 1 : i32
    %7 = arith.select %6, %c1_i32, %c16_i32 : i32
    %8 = vector.broadcast %7 : i32 to vector<32x128xi32>
    %9 = arith.remsi %5, %8 : vector<32x128xi32>
    %c0_i32_6 = arith.constant 0 : i32
    %10 = vector.broadcast %c0_i32_6 : i32 to vector<32x128xi32>
    %11 = arith.cmpi ne, %9, %10 : vector<32x128xi32>
    %c0_i32_7 = arith.constant 0 : i32
    %12 = vector.broadcast %c0_i32_7 : i32 to vector<32x128xi32>
    %13 = arith.cmpi slt, %9, %12 : vector<32x128xi32>
    %c0_i32_8 = arith.constant 0 : i32
    %14 = arith.cmpi slt, %7, %c0_i32_8 : i32
    %15 = vector.broadcast %14 : i1 to vector<32x128xi1>
    %16 = vector.broadcast %15 : vector<32x128xi1> to vector<32x128xi1>
    %17 = arith.xori %13, %16 : vector<32x128xi1>
    %18 = arith.andi %17, %11 : vector<32x128xi1>
    %19 = vector.broadcast %7 : i32 to vector<32x128xi32>
    %20 = arith.addi %9, %19 : vector<32x128xi32>
    %21 = arith.select %18, %20, %9 : vector<32x128xi1>, vector<32x128xi32>
    %c1_9 = arith.constant 1 : index
    %c0_10 = arith.constant 0 : index
    %22 = vector.load %arg6[%c1_9, %c0_10] : memref<34x128xf32, #tpu.memory_space<vmem>>, vector<32x128xf32>
    %c0_i32_11 = arith.constant 0 : i32
    %23 = vector.broadcast %c0_i32_11 : i32 to vector<32x128xi32>
    %24 = arith.cmpi eq, %21, %23 : vector<32x128xi32>
    %c0_12 = arith.constant 0 : index
    %c0_13 = arith.constant 0 : index
    %25 = vector.load %arg6[%c0_12, %c0_13] : memref<34x128xf32, #tpu.memory_space<vmem>>, vector<32x128xf32>
    %cst_14 = arith.constant 0.000000e+00 : f32
    %26 = vector.broadcast %cst_14 : f32 to vector<32x128xf32>
    %27 = arith.select %24, %26, %25 : vector<32x128xi1>, vector<32x128xf32>
    %c15_i32 = arith.constant 15 : i32
    %28 = vector.broadcast %c15_i32 : i32 to vector<32x128xi32>
    %29 = arith.cmpi eq, %21, %28 : vector<32x128xi32>
    %c2 = arith.constant 2 : index
    %c0_15 = arith.constant 0 : index
    %30 = vector.load %arg6[%c2, %c0_15] : memref<34x128xf32, #tpu.memory_space<vmem>>, vector<32x128xf32>
    %cst_16 = arith.constant 0.000000e+00 : f32
    %31 = vector.broadcast %cst_16 : f32 to vector<32x128xf32>
    %32 = arith.select %29, %31, %30 : vector<32x128xi1>, vector<32x128xf32>
    %33 = arith.truncf %27 : vector<32x128xf32> to vector<32x128xbf16>
    %34 = arith.truncf %22 : vector<32x128xf32> to vector<32x128xbf16>
    %35 = arith.truncf %32 : vector<32x128xf32> to vector<32x128xbf16>
    %36 = tpu.concatenate %33, %34, %35 in 1 : vector<32x128xbf16>, vector<32x128xbf16>, vector<32x128xbf16> -> vector<32x384xbf16>
    %c0_17 = arith.constant 0 : index
    %c0_18 = arith.constant 0 : index
    %c0_19 = arith.constant 0 : index
    %37 = vector.load %arg1[%c0_17, %c0_18, %c0_19] : memref<7x384x128xbf16, #tpu.memory_space<vmem>>, vector<1x384x128xbf16>
    %38 = vector.shape_cast %37 : vector<1x384x128xbf16> to vector<384x128xbf16>
    %c0_20 = arith.constant 0 : index
    %c0_21 = arith.constant 0 : index
    %c0_22 = arith.constant 0 : index
    %39 = vector.load %arg2[%c0_20, %c0_21, %c0_22] : memref<7x1x128xf32, #tpu.memory_space<vmem>>, vector<1x1x128xf32>
    %40 = vector.shape_cast %39 : vector<1x1x128xf32> to vector<1x128xf32>
    %cst_23 = arith.constant dense<0.000000e+00> : vector<32x128xf32>
    %41 = tpu.matmul %36, %38, %cst_23 {dimension_numbers = #tpu.dot_dimension_numbers<[1], [0], [0], [1], [0, 0, 1, 1], [], []>} : vector<32x384xbf16>, vector<384x128xbf16>, vector<32x128xf32> -> vector<32x128xf32>
    %42 = vector.broadcast %40 : vector<1x128xf32> to vector<32x128xf32>
    %43 = arith.addf %41, %42 : vector<32x128xf32>
    %cst_24 = arith.constant 0.000000e+00 : f32
    %44 = vector.broadcast %cst_24 : f32 to vector<32x128xf32>
    %45 = arith.maximumf %43, %44 : vector<32x128xf32>
    %c1_25 = arith.constant 1 : index
    %c0_26 = arith.constant 0 : index
    %46 = vector.load %arg7[%c1_25, %c0_26] : memref<34x128xf32, #tpu.memory_space<vmem>>, vector<32x128xf32>
    tpu.vector_store %arg7[%c1_25, %c0_26], %45 {strides = array<i32>} : memref<34x128xf32, #tpu.memory_space<vmem>>, vector<32x128xf32>,
    %47 = tpu.iota {dimensions = array<i32: 0>} : vector<32x128xi32>
    %c16_i32_27 = arith.constant 16 : i32
    %c0_i32_28 = arith.constant 0 : i32
    %48 = arith.cmpi eq, %c16_i32_27, %c0_i32_28 : i32
    %c1_i32_29 = arith.constant 1 : i32
    %49 = arith.select %48, %c1_i32_29, %c16_i32_27 : i32
    %50 = vector.broadcast %49 : i32 to vector<32x128xi32>
    %51 = arith.remsi %47, %50 : vector<32x128xi32>
    %c0_i32_30 = arith.constant 0 : i32
    %52 = vector.broadcast %c0_i32_30 : i32 to vector<32x128xi32>
    %53 = arith.cmpi ne, %51, %52 : vector<32x128xi32>
    %c0_i32_31 = arith.constant 0 : i32
    %54 = vector.broadcast %c0_i32_31 : i32 to vector<32x128xi32>
    %55 = arith.cmpi slt, %51, %54 : vector<32x128xi32>
    %c0_i32_32 = arith.constant 0 : i32
    %56 = arith.cmpi slt, %49, %c0_i32_32 : i32
    %57 = vector.broadcast %56 : i1 to vector<32x128xi1>
    %58 = vector.broadcast %57 : vector<32x128xi1> to vector<32x128xi1>
    %59 = arith.xori %55, %58 : vector<32x128xi1>
    %60 = arith.andi %59, %53 : vector<32x128xi1>
    %61 = vector.broadcast %49 : i32 to vector<32x128xi32>
    %62 = arith.addi %51, %61 : vector<32x128xi32>
    %63 = arith.select %60, %62, %51 : vector<32x128xi1>, vector<32x128xi32>
    %c1_33 = arith.constant 1 : index
    %c0_34 = arith.constant 0 : index
    %64 = vector.load %arg7[%c1_33, %c0_34] : memref<34x128xf32, #tpu.memory_space<vmem>>, vector<32x128xf32>
    %c0_i32_35 = arith.constant 0 : i32
    %65 = vector.broadcast %c0_i32_35 : i32 to vector<32x128xi32>
    %66 = arith.cmpi eq, %63, %65 : vector<32x128xi32>
    %c0_36 = arith.constant 0 : index
    %c0_37 = arith.constant 0 : index
    %67 = vector.load %arg7[%c0_36, %c0_37] : memref<34x128xf32, #tpu.memory_space<vmem>>, vector<32x128xf32>
    %cst_38 = arith.constant 0.000000e+00 : f32
    %68 = vector.broadcast %cst_38 : f32 to vector<32x128xf32>
    %69 = arith.select %66, %68, %67 : vector<32x128xi1>, vector<32x128xf32>
    %c15_i32_39 = arith.constant 15 : i32
    %70 = vector.broadcast %c15_i32_39 : i32 to vector<32x128xi32>
    %71 = arith.cmpi eq, %63, %70 : vector<32x128xi32>
    %c2_40 = arith.constant 2 : index
    %c0_41 = arith.constant 0 : index
    %72 = vector.load %arg7[%c2_40, %c0_41] : memref<34x128xf32, #tpu.memory_space<vmem>>, vector<32x128xf32>
    %cst_42 = arith.constant 0.000000e+00 : f32
    %73 = vector.broadcast %cst_42 : f32 to vector<32x128xf32>
    %74 = arith.select %71, %73, %72 : vector<32x128xi1>, vector<32x128xf32>
    %75 = arith.truncf %69 : vector<32x128xf32> to vector<32x128xbf16>
    %76 = arith.truncf %64 : vector<32x128xf32> to vector<32x128xbf16>
    %77 = arith.truncf %74 : vector<32x128xf32> to vector<32x128xbf16>
    %78 = tpu.concatenate %75, %76, %77 in 1 : vector<32x128xbf16>, vector<32x128xbf16>, vector<32x128xbf16> -> vector<32x384xbf16>
    %c1_43 = arith.constant 1 : index
    %c0_44 = arith.constant 0 : index
    %c0_45 = arith.constant 0 : index
    %79 = vector.load %arg1[%c1_43, %c0_44, %c0_45] : memref<7x384x128xbf16, #tpu.memory_space<vmem>>, vector<1x384x128xbf16>
    %80 = vector.shape_cast %79 : vector<1x384x128xbf16> to vector<384x128xbf16>
    %c1_46 = arith.constant 1 : index
    %c0_47 = arith.constant 0 : index
    %c0_48 = arith.constant 0 : index
    %81 = vector.load %arg2[%c1_46, %c0_47, %c0_48] : memref<7x1x128xf32, #tpu.memory_space<vmem>>, vector<1x1x128xf32>
    %82 = vector.shape_cast %81 : vector<1x1x128xf32> to vector<1x128xf32>
    %cst_49 = arith.constant dense<0.000000e+00> : vector<32x128xf32>
    %83 = tpu.matmul %78, %80, %cst_49 {dimension_numbers = #tpu.dot_dimension_numbers<[1], [0], [0], [1], [0, 0, 1, 1], [], []>} : vector<32x384xbf16>, vector<384x128xbf16>, vector<32x128xf32> -> vector<32x128xf32>
    %84 = vector.broadcast %82 : vector<1x128xf32> to vector<32x128xf32>
    %85 = arith.addf %83, %84 : vector<32x128xf32>
    %cst_50 = arith.constant 0.000000e+00 : f32
    %86 = vector.broadcast %cst_50 : f32 to vector<32x128xf32>
    %87 = arith.maximumf %85, %86 : vector<32x128xf32>
    %c1_51 = arith.constant 1 : index
    %c0_52 = arith.constant 0 : index
    %88 = vector.load %arg6[%c1_51, %c0_52] : memref<34x128xf32, #tpu.memory_space<vmem>>, vector<32x128xf32>
    tpu.vector_store %arg6[%c1_51, %c0_52], %87 {strides = array<i32>} : memref<34x128xf32, #tpu.memory_space<vmem>>, vector<32x128xf32>,
    %89 = tpu.iota {dimensions = array<i32: 0>} : vector<32x128xi32>
    %c16_i32_53 = arith.constant 16 : i32
    %c0_i32_54 = arith.constant 0 : i32
    %90 = arith.cmpi eq, %c16_i32_53, %c0_i32_54 : i32
    %c1_i32_55 = arith.constant 1 : i32
    %91 = arith.select %90, %c1_i32_55, %c16_i32_53 : i32
    %92 = vector.broadcast %91 : i32 to vector<32x128xi32>
    %93 = arith.remsi %89, %92 : vector<32x128xi32>
    %c0_i32_56 = arith.constant 0 : i32
    %94 = vector.broadcast %c0_i32_56 : i32 to vector<32x128xi32>
    %95 = arith.cmpi ne, %93, %94 : vector<32x128xi32>
    %c0_i32_57 = arith.constant 0 : i32
    %96 = vector.broadcast %c0_i32_57 : i32 to vector<32x128xi32>
    %97 = arith.cmpi slt, %93, %96 : vector<32x128xi32>
    %c0_i32_58 = arith.constant 0 : i32
    %98 = arith.cmpi slt, %91, %c0_i32_58 : i32
    %99 = vector.broadcast %98 : i1 to vector<32x128xi1>
    %100 = vector.broadcast %99 : vector<32x128xi1> to vector<32x128xi1>
    %101 = arith.xori %97, %100 : vector<32x128xi1>
    %102 = arith.andi %101, %95 : vector<32x128xi1>
    %103 = vector.broadcast %91 : i32 to vector<32x128xi32>
    %104 = arith.addi %93, %103 : vector<32x128xi32>
    %105 = arith.select %102, %104, %93 : vector<32x128xi1>, vector<32x128xi32>
    %c1_59 = arith.constant 1 : index
    %c0_60 = arith.constant 0 : index
    %106 = vector.load %arg6[%c1_59, %c0_60] : memref<34x128xf32, #tpu.memory_space<vmem>>, vector<32x128xf32>
    %c0_i32_61 = arith.constant 0 : i32
    %107 = vector.broadcast %c0_i32_61 : i32 to vector<32x128xi32>
    %108 = arith.cmpi eq, %105, %107 : vector<32x128xi32>
    %c0_62 = arith.constant 0 : index
    %c0_63 = arith.constant 0 : index
    %109 = vector.load %arg6[%c0_62, %c0_63] : memref<34x128xf32, #tpu.memory_space<vmem>>, vector<32x128xf32>
    %cst_64 = arith.constant 0.000000e+00 : f32
    %110 = vector.broadcast %cst_64 : f32 to vector<32x128xf32>
    %111 = arith.select %108, %110, %109 : vector<32x128xi1>, vector<32x128xf32>
    %c15_i32_65 = arith.constant 15 : i32
    %112 = vector.broadcast %c15_i32_65 : i32 to vector<32x128xi32>
    %113 = arith.cmpi eq, %105, %112 : vector<32x128xi32>
    %c2_66 = arith.constant 2 : index
    %c0_67 = arith.constant 0 : index
    %114 = vector.load %arg6[%c2_66, %c0_67] : memref<34x128xf32, #tpu.memory_space<vmem>>, vector<32x128xf32>
    %cst_68 = arith.constant 0.000000e+00 : f32
    %115 = vector.broadcast %cst_68 : f32 to vector<32x128xf32>
    %116 = arith.select %113, %115, %114 : vector<32x128xi1>, vector<32x128xf32>
    %117 = arith.truncf %111 : vector<32x128xf32> to vector<32x128xbf16>
    %118 = arith.truncf %106 : vector<32x128xf32> to vector<32x128xbf16>
    %119 = arith.truncf %116 : vector<32x128xf32> to vector<32x128xbf16>
    %120 = tpu.concatenate %117, %118, %119 in 1 : vector<32x128xbf16>, vector<32x128xbf16>, vector<32x128xbf16> -> vector<32x384xbf16>
    %c2_69 = arith.constant 2 : index
    %c0_70 = arith.constant 0 : index
    %c0_71 = arith.constant 0 : index
    %121 = vector.load %arg1[%c2_69, %c0_70, %c0_71] : memref<7x384x128xbf16, #tpu.memory_space<vmem>>, vector<1x384x128xbf16>
    %122 = vector.shape_cast %121 : vector<1x384x128xbf16> to vector<384x128xbf16>
    %c2_72 = arith.constant 2 : index
    %c0_73 = arith.constant 0 : index
    %c0_74 = arith.constant 0 : index
    %123 = vector.load %arg2[%c2_72, %c0_73, %c0_74] : memref<7x1x128xf32, #tpu.memory_space<vmem>>, vector<1x1x128xf32>
    %124 = vector.shape_cast %123 : vector<1x1x128xf32> to vector<1x128xf32>
    %cst_75 = arith.constant dense<0.000000e+00> : vector<32x128xf32>
    %125 = tpu.matmul %120, %122, %cst_75 {dimension_numbers = #tpu.dot_dimension_numbers<[1], [0], [0], [1], [0, 0, 1, 1], [], []>} : vector<32x384xbf16>, vector<384x128xbf16>, vector<32x128xf32> -> vector<32x128xf32>
    %126 = vector.broadcast %124 : vector<1x128xf32> to vector<32x128xf32>
    %127 = arith.addf %125, %126 : vector<32x128xf32>
    %cst_76 = arith.constant 0.000000e+00 : f32
    %128 = vector.broadcast %cst_76 : f32 to vector<32x128xf32>
    %129 = arith.maximumf %127, %128 : vector<32x128xf32>
    %c1_77 = arith.constant 1 : index
    %c0_78 = arith.constant 0 : index
    %130 = vector.load %arg7[%c1_77, %c0_78] : memref<34x128xf32, #tpu.memory_space<vmem>>, vector<32x128xf32>
    tpu.vector_store %arg7[%c1_77, %c0_78], %129 {strides = array<i32>} : memref<34x128xf32, #tpu.memory_space<vmem>>, vector<32x128xf32>,
    %131 = tpu.iota {dimensions = array<i32: 0>} : vector<16x128xi32>
    %c8_i32 = arith.constant 8 : i32
    %c0_i32_79 = arith.constant 0 : i32
    %132 = arith.cmpi eq, %c8_i32, %c0_i32_79 : i32
    %c1_i32_80 = arith.constant 1 : i32
    %133 = arith.select %132, %c1_i32_80, %c8_i32 : i32
    %134 = vector.broadcast %133 : i32 to vector<16x128xi32>
    %135 = arith.remsi %131, %134 : vector<16x128xi32>
    %c0_i32_81 = arith.constant 0 : i32
    %136 = vector.broadcast %c0_i32_81 : i32 to vector<16x128xi32>
    %137 = arith.cmpi ne, %135, %136 : vector<16x128xi32>
    %c0_i32_82 = arith.constant 0 : i32
    %138 = vector.broadcast %c0_i32_82 : i32 to vector<16x128xi32>
    %139 = arith.cmpi slt, %135, %138 : vector<16x128xi32>
    %c0_i32_83 = arith.constant 0 : i32
    %140 = arith.cmpi slt, %133, %c0_i32_83 : i32
    %141 = vector.broadcast %140 : i1 to vector<16x128xi1>
    %142 = vector.broadcast %141 : vector<16x128xi1> to vector<16x128xi1>
    %143 = arith.xori %139, %142 : vector<16x128xi1>
    %144 = arith.andi %143, %137 : vector<16x128xi1>
    %145 = vector.broadcast %133 : i32 to vector<16x128xi32>
    %146 = arith.addi %135, %145 : vector<16x128xi32>
    %147 = arith.select %144, %146, %135 : vector<16x128xi1>, vector<16x128xi32>
    %c1_84 = arith.constant 1 : index
    %c0_85 = arith.constant 0 : index
    %148 = tpu.strided_load %arg7[%c1_84, %c0_85] {strides = array<i32: 2, 1>} : memref<34x128xf32, #tpu.memory_space<vmem>>, vector<16x128xf32>
    %c2_86 = arith.constant 2 : index
    %c0_87 = arith.constant 0 : index
    %149 = tpu.strided_load %arg7[%c2_86, %c0_87] {strides = array<i32: 2, 1>} : memref<34x128xf32, #tpu.memory_space<vmem>>, vector<16x128xf32>
    %c0_i32_88 = arith.constant 0 : i32
    %150 = vector.broadcast %c0_i32_88 : i32 to vector<16x128xi32>
    %151 = arith.cmpi eq, %147, %150 : vector<16x128xi32>
    %c0_89 = arith.constant 0 : index
    %c0_90 = arith.constant 0 : index
    %152 = tpu.strided_load %arg7[%c0_89, %c0_90] {strides = array<i32: 2, 1>} : memref<34x128xf32, #tpu.memory_space<vmem>>, vector<16x128xf32>
    %cst_91 = arith.constant 0.000000e+00 : f32
    %153 = vector.broadcast %cst_91 : f32 to vector<16x128xf32>
    %154 = arith.select %151, %153, %152 : vector<16x128xi1>, vector<16x128xf32>
    %155 = arith.truncf %154 : vector<16x128xf32> to vector<16x128xbf16>
    %156 = arith.truncf %148 : vector<16x128xf32> to vector<16x128xbf16>
    %157 = arith.truncf %149 : vector<16x128xf32> to vector<16x128xbf16>
    %158 = tpu.concatenate %155, %156, %157 in 1 : vector<16x128xbf16>, vector<16x128xbf16>, vector<16x128xbf16> -> vector<16x384xbf16>
    %c3 = arith.constant 3 : index
    %c0_92 = arith.constant 0 : index
    %c0_93 = arith.constant 0 : index
    %159 = vector.load %arg1[%c3, %c0_92, %c0_93] : memref<7x384x128xbf16, #tpu.memory_space<vmem>>, vector<1x384x128xbf16>
    %160 = vector.shape_cast %159 : vector<1x384x128xbf16> to vector<384x128xbf16>
    %c3_94 = arith.constant 3 : index
    %c0_95 = arith.constant 0 : index
    %c0_96 = arith.constant 0 : index
    %161 = vector.load %arg2[%c3_94, %c0_95, %c0_96] : memref<7x1x128xf32, #tpu.memory_space<vmem>>, vector<1x1x128xf32>
    %162 = vector.shape_cast %161 : vector<1x1x128xf32> to vector<1x128xf32>
    %cst_97 = arith.constant dense<0.000000e+00> : vector<16x128xf32>
    %163 = tpu.matmul %158, %160, %cst_97 {dimension_numbers = #tpu.dot_dimension_numbers<[1], [0], [0], [1], [0, 0, 1, 1], [], []>} : vector<16x384xbf16>, vector<384x128xbf16>, vector<16x128xf32> -> vector<16x128xf32>
    %164 = vector.broadcast %162 : vector<1x128xf32> to vector<16x128xf32>
    %165 = arith.addf %163, %164 : vector<16x128xf32>
    %cst_98 = arith.constant 0.000000e+00 : f32
    %166 = vector.broadcast %cst_98 : f32 to vector<16x128xf32>
    %167 = arith.maximumf %165, %166 : vector<16x128xf32>
    %c1_99 = arith.constant 1 : index
    %c0_100 = arith.constant 0 : index
    %168 = vector.load %arg6[%c1_99, %c0_100] : memref<34x128xf32, #tpu.memory_space<vmem>>, vector<16x128xf32>
    tpu.vector_store %arg6[%c1_99, %c0_100], %167 {strides = array<i32>} : memref<34x128xf32, #tpu.memory_space<vmem>>, vector<16x128xf32>,
    %169 = tpu.iota {dimensions = array<i32: 0>} : vector<16x128xi32>
    %c8_i32_101 = arith.constant 8 : i32
    %c0_i32_102 = arith.constant 0 : i32
    %170 = arith.cmpi eq, %c8_i32_101, %c0_i32_102 : i32
    %c1_i32_103 = arith.constant 1 : i32
    %171 = arith.select %170, %c1_i32_103, %c8_i32_101 : i32
    %172 = vector.broadcast %171 : i32 to vector<16x128xi32>
    %173 = arith.remsi %169, %172 : vector<16x128xi32>
    %c0_i32_104 = arith.constant 0 : i32
    %174 = vector.broadcast %c0_i32_104 : i32 to vector<16x128xi32>
    %175 = arith.cmpi ne, %173, %174 : vector<16x128xi32>
    %c0_i32_105 = arith.constant 0 : i32
    %176 = vector.broadcast %c0_i32_105 : i32 to vector<16x128xi32>
    %177 = arith.cmpi slt, %173, %176 : vector<16x128xi32>
    %c0_i32_106 = arith.constant 0 : i32
    %178 = arith.cmpi slt, %171, %c0_i32_106 : i32
    %179 = vector.broadcast %178 : i1 to vector<16x128xi1>
    %180 = vector.broadcast %179 : vector<16x128xi1> to vector<16x128xi1>
    %181 = arith.xori %177, %180 : vector<16x128xi1>
    %182 = arith.andi %181, %175 : vector<16x128xi1>
    %183 = vector.broadcast %171 : i32 to vector<16x128xi32>
    %184 = arith.addi %173, %183 : vector<16x128xi32>
    %185 = arith.select %182, %184, %173 : vector<16x128xi1>, vector<16x128xi32>
    %c1_107 = arith.constant 1 : index
    %c0_108 = arith.constant 0 : index
    %186 = vector.load %arg6[%c1_107, %c0_108] : memref<34x128xf32, #tpu.memory_space<vmem>>, vector<16x128xf32>
    %c0_i32_109 = arith.constant 0 : i32
    %187 = vector.broadcast %c0_i32_109 : i32 to vector<16x128xi32>
    %188 = arith.cmpi eq, %185, %187 : vector<16x128xi32>
    %c0_110 = arith.constant 0 : index
    %c0_111 = arith.constant 0 : index
    %189 = vector.load %arg6[%c0_110, %c0_111] : memref<34x128xf32, #tpu.memory_space<vmem>>, vector<16x128xf32>
    %cst_112 = arith.constant 0.000000e+00 : f32
    %190 = vector.broadcast %cst_112 : f32 to vector<16x128xf32>
    %191 = arith.select %188, %190, %189 : vector<16x128xi1>, vector<16x128xf32>
    %c7_i32 = arith.constant 7 : i32
    %192 = vector.broadcast %c7_i32 : i32 to vector<16x128xi32>
    %193 = arith.cmpi eq, %185, %192 : vector<16x128xi32>
    %c2_113 = arith.constant 2 : index
    %c0_114 = arith.constant 0 : index
    %194 = vector.load %arg6[%c2_113, %c0_114] : memref<34x128xf32, #tpu.memory_space<vmem>>, vector<16x128xf32>
    %cst_115 = arith.constant 0.000000e+00 : f32
    %195 = vector.broadcast %cst_115 : f32 to vector<16x128xf32>
    %196 = arith.select %193, %195, %194 : vector<16x128xi1>, vector<16x128xf32>
    %197 = arith.truncf %191 : vector<16x128xf32> to vector<16x128xbf16>
    %198 = arith.truncf %186 : vector<16x128xf32> to vector<16x128xbf16>
    %199 = arith.truncf %196 : vector<16x128xf32> to vector<16x128xbf16>
    %200 = tpu.concatenate %197, %198, %199 in 1 : vector<16x128xbf16>, vector<16x128xbf16>, vector<16x128xbf16> -> vector<16x384xbf16>
    %c4 = arith.constant 4 : index
    %c0_116 = arith.constant 0 : index
    %c0_117 = arith.constant 0 : index
    %201 = vector.load %arg1[%c4, %c0_116, %c0_117] : memref<7x384x128xbf16, #tpu.memory_space<vmem>>, vector<1x384x128xbf16>
    %202 = vector.shape_cast %201 : vector<1x384x128xbf16> to vector<384x128xbf16>
    %c4_118 = arith.constant 4 : index
    %c0_119 = arith.constant 0 : index
    %c0_120 = arith.constant 0 : index
    %203 = vector.load %arg2[%c4_118, %c0_119, %c0_120] : memref<7x1x128xf32, #tpu.memory_space<vmem>>, vector<1x1x128xf32>
    %204 = vector.shape_cast %203 : vector<1x1x128xf32> to vector<1x128xf32>
    %cst_121 = arith.constant dense<0.000000e+00> : vector<16x128xf32>
    %205 = tpu.matmul %200, %202, %cst_121 {dimension_numbers = #tpu.dot_dimension_numbers<[1], [0], [0], [1], [0, 0, 1, 1], [], []>} : vector<16x384xbf16>, vector<384x128xbf16>, vector<16x128xf32> -> vector<16x128xf32>
    %206 = vector.broadcast %204 : vector<1x128xf32> to vector<16x128xf32>
    %207 = arith.addf %205, %206 : vector<16x128xf32>
    %cst_122 = arith.constant 0.000000e+00 : f32
    %208 = vector.broadcast %cst_122 : f32 to vector<16x128xf32>
    %209 = arith.maximumf %207, %208 : vector<16x128xf32>
    %c1_123 = arith.constant 1 : index
    %c0_124 = arith.constant 0 : index
    %210 = vector.load %arg7[%c1_123, %c0_124] : memref<34x128xf32, #tpu.memory_space<vmem>>, vector<16x128xf32>
    tpu.vector_store %arg7[%c1_123, %c0_124], %209 {strides = array<i32>} : memref<34x128xf32, #tpu.memory_space<vmem>>, vector<16x128xf32>,
    %211 = tpu.iota {dimensions = array<i32: 0>} : vector<8x128xi32>
    %c4_i32 = arith.constant 4 : i32
    %c0_i32_125 = arith.constant 0 : i32
    %212 = arith.cmpi eq, %c4_i32, %c0_i32_125 : i32
    %c1_i32_126 = arith.constant 1 : i32
    %213 = arith.select %212, %c1_i32_126, %c4_i32 : i32
    %214 = vector.broadcast %213 : i32 to vector<8x128xi32>
    %215 = arith.remsi %211, %214 : vector<8x128xi32>
    %c0_i32_127 = arith.constant 0 : i32
    %216 = vector.broadcast %c0_i32_127 : i32 to vector<8x128xi32>
    %217 = arith.cmpi ne, %215, %216 : vector<8x128xi32>
    %c0_i32_128 = arith.constant 0 : i32
    %218 = vector.broadcast %c0_i32_128 : i32 to vector<8x128xi32>
    %219 = arith.cmpi slt, %215, %218 : vector<8x128xi32>
    %c0_i32_129 = arith.constant 0 : i32
    %220 = arith.cmpi slt, %213, %c0_i32_129 : i32
    %221 = vector.broadcast %220 : i1 to vector<8x128xi1>
    %222 = vector.broadcast %221 : vector<8x128xi1> to vector<8x128xi1>
    %223 = arith.xori %219, %222 : vector<8x128xi1>
    %224 = arith.andi %223, %217 : vector<8x128xi1>
    %225 = vector.broadcast %213 : i32 to vector<8x128xi32>
    %226 = arith.addi %215, %225 : vector<8x128xi32>
    %227 = arith.select %224, %226, %215 : vector<8x128xi1>, vector<8x128xi32>
    %c1_130 = arith.constant 1 : index
    %c0_131 = arith.constant 0 : index
    %228 = tpu.strided_load %arg7[%c1_130, %c0_131] {strides = array<i32: 2, 1>} : memref<34x128xf32, #tpu.memory_space<vmem>>, vector<8x128xf32>
    %c2_132 = arith.constant 2 : index
    %c0_133 = arith.constant 0 : index
    %229 = tpu.strided_load %arg7[%c2_132, %c0_133] {strides = array<i32: 2, 1>} : memref<34x128xf32, #tpu.memory_space<vmem>>, vector<8x128xf32>
    %c0_i32_134 = arith.constant 0 : i32
    %230 = vector.broadcast %c0_i32_134 : i32 to vector<8x128xi32>
    %231 = arith.cmpi eq, %227, %230 : vector<8x128xi32>
    %c0_135 = arith.constant 0 : index
    %c0_136 = arith.constant 0 : index
    %232 = tpu.strided_load %arg7[%c0_135, %c0_136] {strides = array<i32: 2, 1>} : memref<34x128xf32, #tpu.memory_space<vmem>>, vector<8x128xf32>
    %cst_137 = arith.constant 0.000000e+00 : f32
    %233 = vector.broadcast %cst_137 : f32 to vector<8x128xf32>
    %234 = arith.select %231, %233, %232 : vector<8x128xi1>, vector<8x128xf32>
    %235 = arith.truncf %234 : vector<8x128xf32> to vector<8x128xbf16>
    %236 = arith.truncf %228 : vector<8x128xf32> to vector<8x128xbf16>
    %237 = arith.truncf %229 : vector<8x128xf32> to vector<8x128xbf16>
    %238 = tpu.concatenate %235, %236, %237 in 1 : vector<8x128xbf16>, vector<8x128xbf16>, vector<8x128xbf16> -> vector<8x384xbf16>
    %c5 = arith.constant 5 : index
    %c0_138 = arith.constant 0 : index
    %c0_139 = arith.constant 0 : index
    %239 = vector.load %arg1[%c5, %c0_138, %c0_139] : memref<7x384x128xbf16, #tpu.memory_space<vmem>>, vector<1x384x128xbf16>
    %240 = vector.shape_cast %239 : vector<1x384x128xbf16> to vector<384x128xbf16>
    %c5_140 = arith.constant 5 : index
    %c0_141 = arith.constant 0 : index
    %c0_142 = arith.constant 0 : index
    %241 = vector.load %arg2[%c5_140, %c0_141, %c0_142] : memref<7x1x128xf32, #tpu.memory_space<vmem>>, vector<1x1x128xf32>
    %242 = vector.shape_cast %241 : vector<1x1x128xf32> to vector<1x128xf32>
    %cst_143 = arith.constant dense<0.000000e+00> : vector<8x128xf32>
    %243 = tpu.matmul %238, %240, %cst_143 {dimension_numbers = #tpu.dot_dimension_numbers<[1], [0], [0], [1], [0, 0, 1, 1], [], []>} : vector<8x384xbf16>, vector<384x128xbf16>, vector<8x128xf32> -> vector<8x128xf32>
    %244 = vector.broadcast %242 : vector<1x128xf32> to vector<8x128xf32>
    %245 = arith.addf %243, %244 : vector<8x128xf32>
    %cst_144 = arith.constant 0.000000e+00 : f32
    %246 = vector.broadcast %cst_144 : f32 to vector<8x128xf32>
    %247 = arith.maximumf %245, %246 : vector<8x128xf32>
    %c1_145 = arith.constant 1 : index
    %c0_146 = arith.constant 0 : index
    %248 = vector.load %arg6[%c1_145, %c0_146] : memref<34x128xf32, #tpu.memory_space<vmem>>, vector<8x128xf32>
    tpu.vector_store %arg6[%c1_145, %c0_146], %247 {strides = array<i32>} : memref<34x128xf32, #tpu.memory_space<vmem>>, vector<8x128xf32>,
    %249 = tpu.iota {dimensions = array<i32: 0>} : vector<8x128xi32>
    %c4_i32_147 = arith.constant 4 : i32
    %c0_i32_148 = arith.constant 0 : i32
    %250 = arith.cmpi eq, %c4_i32_147, %c0_i32_148 : i32
    %c1_i32_149 = arith.constant 1 : i32
    %251 = arith.select %250, %c1_i32_149, %c4_i32_147 : i32
    %252 = vector.broadcast %251 : i32 to vector<8x128xi32>
    %253 = arith.remsi %249, %252 : vector<8x128xi32>
    %c0_i32_150 = arith.constant 0 : i32
    %254 = vector.broadcast %c0_i32_150 : i32 to vector<8x128xi32>
    %255 = arith.cmpi ne, %253, %254 : vector<8x128xi32>
    %c0_i32_151 = arith.constant 0 : i32
    %256 = vector.broadcast %c0_i32_151 : i32 to vector<8x128xi32>
    %257 = arith.cmpi slt, %253, %256 : vector<8x128xi32>
    %c0_i32_152 = arith.constant 0 : i32
    %258 = arith.cmpi slt, %251, %c0_i32_152 : i32
    %259 = vector.broadcast %258 : i1 to vector<8x128xi1>
    %260 = vector.broadcast %259 : vector<8x128xi1> to vector<8x128xi1>
    %261 = arith.xori %257, %260 : vector<8x128xi1>
    %262 = arith.andi %261, %255 : vector<8x128xi1>
    %263 = vector.broadcast %251 : i32 to vector<8x128xi32>
    %264 = arith.addi %253, %263 : vector<8x128xi32>
    %265 = arith.select %262, %264, %253 : vector<8x128xi1>, vector<8x128xi32>
    %c1_153 = arith.constant 1 : index
    %c0_154 = arith.constant 0 : index
    %266 = vector.load %arg6[%c1_153, %c0_154] : memref<34x128xf32, #tpu.memory_space<vmem>>, vector<8x128xf32>
    %c0_i32_155 = arith.constant 0 : i32
    %267 = vector.broadcast %c0_i32_155 : i32 to vector<8x128xi32>
    %268 = arith.cmpi eq, %265, %267 : vector<8x128xi32>
    %c0_156 = arith.constant 0 : index
    %c0_157 = arith.constant 0 : index
    %269 = vector.load %arg6[%c0_156, %c0_157] : memref<34x128xf32, #tpu.memory_space<vmem>>, vector<8x128xf32>
    %cst_158 = arith.constant 0.000000e+00 : f32
    %270 = vector.broadcast %cst_158 : f32 to vector<8x128xf32>
    %271 = arith.select %268, %270, %269 : vector<8x128xi1>, vector<8x128xf32>
    %c3_i32 = arith.constant 3 : i32
    %272 = vector.broadcast %c3_i32 : i32 to vector<8x128xi32>
    %273 = arith.cmpi eq, %265, %272 : vector<8x128xi32>
    %c2_159 = arith.constant 2 : index
    %c0_160 = arith.constant 0 : index
    %274 = vector.load %arg6[%c2_159, %c0_160] : memref<34x128xf32, #tpu.memory_space<vmem>>, vector<8x128xf32>
    %cst_161 = arith.constant 0.000000e+00 : f32
    %275 = vector.broadcast %cst_161 : f32 to vector<8x128xf32>
    %276 = arith.select %273, %275, %274 : vector<8x128xi1>, vector<8x128xf32>
    %277 = arith.truncf %271 : vector<8x128xf32> to vector<8x128xbf16>
    %278 = arith.truncf %266 : vector<8x128xf32> to vector<8x128xbf16>
    %279 = arith.truncf %276 : vector<8x128xf32> to vector<8x128xbf16>
    %280 = tpu.concatenate %277, %278, %279 in 1 : vector<8x128xbf16>, vector<8x128xbf16>, vector<8x128xbf16> -> vector<8x384xbf16>
    %c6 = arith.constant 6 : index
    %c0_162 = arith.constant 0 : index
    %c0_163 = arith.constant 0 : index
    %281 = vector.load %arg1[%c6, %c0_162, %c0_163] : memref<7x384x128xbf16, #tpu.memory_space<vmem>>, vector<1x384x128xbf16>
    %282 = vector.shape_cast %281 : vector<1x384x128xbf16> to vector<384x128xbf16>
    %c6_164 = arith.constant 6 : index
    %c0_165 = arith.constant 0 : index
    %c0_166 = arith.constant 0 : index
    %283 = vector.load %arg2[%c6_164, %c0_165, %c0_166] : memref<7x1x128xf32, #tpu.memory_space<vmem>>, vector<1x1x128xf32>
    %284 = vector.shape_cast %283 : vector<1x1x128xf32> to vector<1x128xf32>
    %cst_167 = arith.constant dense<0.000000e+00> : vector<8x128xf32>
    %285 = tpu.matmul %280, %282, %cst_167 {dimension_numbers = #tpu.dot_dimension_numbers<[1], [0], [0], [1], [0, 0, 1, 1], [], []>} : vector<8x384xbf16>, vector<384x128xbf16>, vector<8x128xf32> -> vector<8x128xf32>
    %286 = vector.broadcast %284 : vector<1x128xf32> to vector<8x128xf32>
    %287 = arith.addf %285, %286 : vector<8x128xf32>
    %cst_168 = arith.constant 0.000000e+00 : f32
    %288 = vector.broadcast %cst_168 : f32 to vector<8x128xf32>
    %289 = arith.maximumf %287, %288 : vector<8x128xf32>
    %c1_169 = arith.constant 1 : index
    %c0_170 = arith.constant 0 : index
    %290 = vector.load %arg7[%c1_169, %c0_170] : memref<34x128xf32, #tpu.memory_space<vmem>>, vector<8x128xf32>
    tpu.vector_store %arg7[%c1_169, %c0_170], %289 {strides = array<i32>} : memref<34x128xf32, #tpu.memory_space<vmem>>, vector<8x128xf32>,
    %c1_171 = arith.constant 1 : index
    %c0_172 = arith.constant 0 : index
    %291 = tpu.strided_load %arg7[%c1_171, %c0_172] {strides = array<i32: 4, 1>} : memref<34x128xf32, #tpu.memory_space<vmem>>, vector<2x128xf32>
    %c2_173 = arith.constant 2 : index
    %c0_174 = arith.constant 0 : index
    %292 = tpu.strided_load %arg7[%c2_173, %c0_174] {strides = array<i32: 4, 1>} : memref<34x128xf32, #tpu.memory_space<vmem>>, vector<2x128xf32>
    %293 = arith.addf %291, %292 : vector<2x128xf32>
    %c3_175 = arith.constant 3 : index
    %c0_176 = arith.constant 0 : index
    %294 = tpu.strided_load %arg7[%c3_175, %c0_176] {strides = array<i32: 4, 1>} : memref<34x128xf32, #tpu.memory_space<vmem>>, vector<2x128xf32>
    %295 = arith.addf %293, %294 : vector<2x128xf32>
    %c4_177 = arith.constant 4 : index
    %c0_178 = arith.constant 0 : index
    %296 = tpu.strided_load %arg7[%c4_177, %c0_178] {strides = array<i32: 4, 1>} : memref<34x128xf32, #tpu.memory_space<vmem>>, vector<2x128xf32>
    %297 = arith.addf %295, %296 : vector<2x128xf32>
    %298 = arith.truncf %297 : vector<2x128xf32> to vector<2x128xbf16>
    %c0_179 = arith.constant 0 : index
    %c0_180 = arith.constant 0 : index
    %299 = vector.load %arg3[%c0_179, %c0_180] : memref<128x128xbf16, #tpu.memory_space<vmem>>, vector<128x128xbf16>
    %cst_181 = arith.constant dense<0.000000e+00> : vector<2x128xf32>
    %300 = tpu.matmul %298, %299, %cst_181 {dimension_numbers = #tpu.dot_dimension_numbers<[1], [0], [0], [1], [0, 0, 1, 1], [], []>} : vector<2x128xbf16>, vector<128x128xbf16>, vector<2x128xf32> -> vector<2x128xf32>
    %c0_182 = arith.constant 0 : index
    %c0_183 = arith.constant 0 : index
    %301 = vector.load %arg4[%c0_182, %c0_183] : memref<1x128xf32, #tpu.memory_space<vmem>>, vector<1x128xf32>
    %302 = vector.broadcast %301 : vector<1x128xf32> to vector<2x128xf32>
    %303 = arith.addf %300, %302 : vector<2x128xf32>
    %c0_184 = arith.constant 0 : index
    %c0_185 = arith.constant 0 : index
    %304 = vector.load %arg5[%c0_184, %c0_185] : memref<2x128xf32, #tpu.memory_space<vmem>>, vector<2x128xf32>
    tpu.vector_store %arg5[%c0_184, %c0_185], %303 {strides = array<i32>} : memref<2x128xf32, #tpu.memory_space<vmem>>, vector<2x128xf32>,
    return
  }
}

</mosaic_0001>

<llo_original>
// kernel: forward.1
$region0: #{forward.1}
  #allocation0 [shape = 'u32[]', space=smem, size = 0x4, offset = 0x4, fixed_abs, tag = 'smem constant byte address 0x4 - core index']
  #allocation1 [shape = 'u32[144,128]{1,0:T(1,128)}', space=vmem, size = 0x12000, scoped, tag = 'internal scratch']
  #allocation2 [shape = 'f32[34,128]{1,0:T(8,128)}', space=vmem, size = 0x5000, scoped, tag = 'scratch operand']
  #allocation3 [shape = 'f32[34,128]{1,0:T(8,128)}', space=vmem, size = 0x5000, scoped, tag = 'scratch operand']
  %s0 = inlined_call_operand.vmem [shape: f32[32,128], index: 0, kind: input, shape index: {}]
  %s1 = inlined_call_operand.hbm [shape: bf16[7,384,128], index: 1, kind: input, shape index: {}]
  %s2 = inlined_call_operand.vmem [shape: f32[7,1,128], index: 2, kind: input, shape index: {}]
  %s3 = inlined_call_operand.vmem [shape: bf16[128,128], index: 3, kind: input, shape index: {}]
  %s4 = inlined_call_operand.vmem [shape: f32[1,128], index: 4, kind: input, shape index: {}]
  %s5 = inlined_call_operand.hbm [shape: f32[2,128], index: 5, kind: output, shape index: {}]
  %s6 = sld [smem:[#allocation0]]
  $region34: #{forward.1} parent=0
    _
  %s8 = ssub.s32 1, %s6
  %s9 = scalar_select 0, %s8, %s6
  $region1: #{forward.1} parent=0
    #allocation4 [shape = 'u8[688128]{0}', space=vmem, size = 0xa8000, scoped, tag = 'input window, operand 1, single buffered']
    #allocation5 [shape = 's32[1]{0}', space=sflag, size = 0x4, scoped, tag = 'scoped memory for forward.1']
    #allocation6 [shape = 's32[1]{0}', space=sflag, size = 0x4, scoped, tag = 'scoped memory for forward.1']
    #allocation7 [shape = 'u8[1024]{0}', space=vmem, size = 0x400, scoped, tag = 'output window, operand 0, single buffered']
    %10 = vsyncpa [#allocation5], 0
    %11 = vsyncpa [#allocation6], 0
    // Predicated region
    $region2: #{forward.1} parent=1 // pred_check
      _
    $region3: #{forward.1} parent=1 // pred_check_branch
      %13 = sbr.rel (0) target = $region5
    $region4: #{forward.1} parent=1 // pred_region
      _
    $region5: #{forward.1} parent=1 // pred_fallthru
      _
    // Predicated region
    $region6: #{forward.1} parent=1 // pred_check
      _
    $region7: #{forward.1} parent=1 // pred_check_branch
      %15 = sbr.rel (0) target = $region9
    $region8: #{forward.1} parent=1 // pred_region
      %s17 = ssub.s32 21504, 21504
      %18 = vsyncadd [#allocation5], %s17
      %s19 = sshll.u32 [#allocation4], 4
      %s20 = int_to_ptr.vmem [resolvable:$true] %s19
      %25 = dma.hbm_to_vmem [thread:$0]  %s1, 21504, %s20, [#allocation5], 64, 64, 4
    $region9: #{forward.1} parent=1 // pred_fallthru
      _
    // Predicated region
    $region10: #{forward.1} parent=1 // pred_check
      _
    $region11: #{forward.1} parent=1 // pred_check_branch
      %27 = sbr.rel (0) target = $region13
    $region12: #{forward.1} parent=1 // pred_region
      _
    $region13: #{forward.1} parent=1 // pred_fallthru
      _
    // Predicated region
    $region14: #{forward.1} parent=1 // pred_check
      _
    $region15: #{forward.1} parent=1 // pred_check_branch
      %29 = sbr.rel (0) target = $region17
    $region16: #{forward.1} parent=1 // pred_region
      _
    $region17: #{forward.1} parent=1 // pred_fallthru
      _
    // Predicated region
    $region18: #{forward.1} parent=1 // pred_check
      _
    $region19: #{forward.1} parent=1 // pred_check_branch
      %31 = sbr.rel (0) target = $region21
    $region20: #{forward.1} parent=1 // pred_region
      _
    $region21: #{forward.1} parent=1 // pred_fallthru
      _
    // Predicated region
    $region22: #{forward.1} parent=1 // pred_check
      _
    $region23: #{forward.1} parent=1 // pred_check_branch
      %33 = sbr.rel (0) target = $region25
    $region24: #{forward.1} parent=1 // pred_region
      %34 = dma.done [#allocation5], 21504
    $region25: #{forward.1} parent=1 // pred_fallthru
      _
    %36 = vst [vmem:[#allocation2] sm:$0xff] 0.0
    %37 = vst [vmem:[#allocation2 + $0x8] sm:$0xff] 0.0
    %38 = vst [vmem:[#allocation2 + $0x10] sm:$0xff] 0.0
    %39 = vst [vmem:[#allocation2 + $0x18] sm:$0xff] 0.0
    %40 = vst [vmem:[#allocation2 + $0x20] sm:$0x3] 0.0
    %41 = vst [vmem:[#allocation3] sm:$0xff] 0.0
    %42 = vst [vmem:[#allocation3 + $0x8] sm:$0xff] 0.0
    %43 = vst [vmem:[#allocation3 + $0x10] sm:$0xff] 0.0
    %44 = vst [vmem:[#allocation3 + $0x18] sm:$0xff] 0.0
    %45 = vst [vmem:[#allocation3 + $0x20] sm:$0x3] 0.0
    %v46 = vld [vmem:[%s0] sm:$0xff]
    %v47 = vld [vmem:[%s0 + $0x8] sm:$0xff]
    %v48 = vld [vmem:[%s0 + $0x10] sm:$0xff]
    %v49 = vld [vmem:[%s0 + $0x18] sm:$0xff]
    %50 = vst [vmem:[#allocation2 + $0x1] sm:$0xff] %v46
    %51 = vst [vmem:[#allocation2 + $0x9] sm:$0xff] %v47
    %52 = vst [vmem:[#allocation2 + $0x11] sm:$0xff] %v48
    %53 = vst [vmem:[#allocation2 + $0x19] sm:$0xff] %v49
    %v54 = vlaneseq
    %v55 = vshrl.u32 %v54, 7
    %v56 = vadd.s32 %v55, 8
    %v57 = vadd.s32 %v55, 16
    %v58 = vadd.s32 %v55, 24
    %vm59 = vcmp.lt.s32.totalorder %v55, 0
    %v60 = vsub.s32 0, %v55
    %v61 = vsel %vm59, %v60, %v55
    %v62 = vshrl.u32 %v61, 4
    %v63 = vand.u32 %v61, 15
    %v64 = vsub.s32 0, %v63
    %v65 = vsel %vm59, %v64, %v63
    %vm66 = vcmp.lt.s32.totalorder %v56, 0
    %v67 = vsub.s32 0, %v56
    %v68 = vsel %vm66, %v67, %v56
    %v69 = vshrl.u32 %v68, 4
    %v70 = vand.u32 %v68, 15
    %v71 = vsub.s32 0, %v70
    %v72 = vsel %vm66, %v71, %v70
    %vm73 = vcmp.lt.s32.totalorder %v57, 0
    %v74 = vsub.s32 0, %v57
    %v75 = vsel %vm73, %v74, %v57
    %v76 = vshrl.u32 %v75, 4
    %v77 = vand.u32 %v75, 15
    %v78 = vsub.s32 0, %v77
    %v79 = vsel %vm73, %v78, %v77
    %vm80 = vcmp.lt.s32.totalorder %v58, 0
    %v81 = vsub.s32 0, %v58
    %v82 = vsel %vm80, %v81, %v58
    %v83 = vshrl.u32 %v82, 4
    %v84 = vand.u32 %v82, 15
    %v85 = vsub.s32 0, %v84
    %v86 = vsel %vm80, %v85, %v84
    %vm87 = vcmp.ne.s32.totalorder %v65, 0
    %vm88 = vcmp.ne.s32.totalorder %v72, 0
    %vm89 = vcmp.ne.s32.totalorder %v79, 0
    %vm90 = vcmp.ne.s32.totalorder %v86, 0
    %vm91 = vcmp.lt.s32.totalorder %v65, 0
    %vm92 = vcmp.lt.s32.totalorder %v72, 0
    %vm93 = vcmp.lt.s32.totalorder %v79, 0
    %vm94 = vcmp.lt.s32.totalorder %v86, 0
    %vm95 = vmand %vm91, %vm87
    %vm96 = vmand %vm92, %vm88
    %vm97 = vmand %vm93, %vm89
    %vm98 = vmand %vm94, %vm90
    %v99 = vadd.s32 %v65, 16
    %v100 = vadd.s32 %v72, 16
    %v101 = vadd.s32 %v79, 16
    %v102 = vadd.s32 %v86, 16
    %v103 = vsel %vm95, %v99, %v65
    %v104 = vsel %vm96, %v100, %v72
    %v105 = vsel %vm97, %v101, %v79
    %v106 = vsel %vm98, %v102, %v86
    %v107 = vld [vmem:[#allocation2 + $0x1] sm:$0xff]
    %v108 = vld [vmem:[#allocation2 + $0x9] sm:$0xff]
    %v109 = vld [vmem:[#allocation2 + $0x11] sm:$0xff]
    %v110 = vld [vmem:[#allocation2 + $0x19] sm:$0xff]
    %vm111 = vcmp.eq.s32.totalorder %v103, 0
    %vm112 = vcmp.eq.s32.totalorder %v104, 0
    %vm113 = vcmp.eq.s32.totalorder %v105, 0
    %vm114 = vcmp.eq.s32.totalorder %v106, 0
    %v115 = vld [vmem:[#allocation2] sm:$0xff]
    %v116 = vld [vmem:[#allocation2 + $0x8] sm:$0xff]
    %v117 = vld [vmem:[#allocation2 + $0x10] sm:$0xff]
    %v118 = vld [vmem:[#allocation2 + $0x18] sm:$0xff]
    %v119 = vsel %vm111, 0.0, %v115
    %v120 = vsel %vm112, 0.0, %v116
    %v121 = vsel %vm113, 0.0, %v117
    %v122 = vsel %vm114, 0.0, %v118
    %vm123 = vcmp.eq.s32.totalorder %v103, 15
    %vm124 = vcmp.eq.s32.totalorder %v104, 15
    %vm125 = vcmp.eq.s32.totalorder %v105, 15
    %vm126 = vcmp.eq.s32.totalorder %v106, 15
    %v127 = vld [vmem:[#allocation2 + $0x2] sm:$0xff]
    %v128 = vld [vmem:[#allocation2 + $0xa] sm:$0xff]
    %v129 = vld [vmem:[#allocation2 + $0x12] sm:$0xff]
    %v130 = vld [vmem:[#allocation2 + $0x1a] sm:$0xff]
    %v131 = vsel %vm123, 0.0, %v127
    %v132 = vsel %vm124, 0.0, %v128
    %v133 = vsel %vm125, 0.0, %v129
    %v134 = vsel %vm126, 0.0, %v130
    %v135 = vpack.c.bf16 %v120, %v119
    %v136 = vpack.c.bf16 %v122, %v121
    %v137 = vpack.c.bf16 %v108, %v107
    %v138 = vpack.c.bf16 %v110, %v109
    %v139 = vpack.c.bf16 %v132, %v131
    %v140 = vpack.c.bf16 %v134, %v133
    %v141 = vld [vmem:[#allocation4] sm:$0xf]
    %v142 = vld [vmem:[#allocation4 + $0x4] sm:$0xf]
    %v143 = vld [vmem:[#allocation4 + $0x8] sm:$0xf]
    %v144 = vld [vmem:[#allocation4 + $0xc] sm:$0xf]
    %v145 = vld [vmem:[#allocation4 + $0x10] sm:$0xf]
    %v146 = vld [vmem:[#allocation4 + $0x14] sm:$0xf]
    %v147 = vld [vmem:[#allocation4 + $0x18] sm:$0xf]
    %v148 = vld [vmem:[#allocation4 + $0x1c] sm:$0xf]
    %v149 = vld [vmem:[#allocation4 + $0x20] sm:$0xf]
    %v150 = vld [vmem:[#allocation4 + $0x24] sm:$0xf]
    %v151 = vld [vmem:[#allocation4 + $0x28] sm:$0xf]
    %v152 = vld [vmem:[#allocation4 + $0x2c] sm:$0xf]
    %v153 = vld [vmem:[#allocation4 + $0x30] sm:$0xf]
    %v154 = vld [vmem:[#allocation4 + $0x34] sm:$0xf]
    %v155 = vld [vmem:[#allocation4 + $0x38] sm:$0xf]
    %v156 = vld [vmem:[#allocation4 + $0x3c] sm:$0xf]
    %v157 = vld [vmem:[#allocation4 + $0x40] sm:$0xf]
    %v158 = vld [vmem:[#allocation4 + $0x44] sm:$0xf]
    %v159 = vld [vmem:[#allocation4 + $0x48] sm:$0xf]
    %v160 = vld [vmem:[#allocation4 + $0x4c] sm:$0xf]
    %v161 = vld [vmem:[#allocation4 + $0x50] sm:$0xf]
    %v162 = vld [vmem:[#allocation4 + $0x54] sm:$0xf]
    %v163 = vld [vmem:[#allocation4 + $0x58] sm:$0xf]
    %v164 = vld [vmem:[#allocation4 + $0x5c] sm:$0xf]
    %v165 = vld [vmem:[#allocation4 + $0x60] sm:$0xf]
    %v166 = vld [vmem:[#allocation4 + $0x64] sm:$0xf]
    %v167 = vld [vmem:[#allocation4 + $0x68] sm:$0xf]
    %v168 = vld [vmem:[#allocation4 + $0x6c] sm:$0xf]
    %v169 = vld [vmem:[#allocation4 + $0x70] sm:$0xf]
    %v170 = vld [vmem:[#allocation4 + $0x74] sm:$0xf]
    %v171 = vld [vmem:[#allocation4 + $0x78] sm:$0xf]
    %v172 = vld [vmem:[#allocation4 + $0x7c] sm:$0xf]
    %v173 = vld [vmem:[#allocation4 + $0x80] sm:$0xf]
    %v174 = vld [vmem:[#allocation4 + $0x84] sm:$0xf]
    %v175 = vld [vmem:[#allocation4 + $0x88] sm:$0xf]
    %v176 = vld [vmem:[#allocation4 + $0x8c] sm:$0xf]
    %v177 = vld [vmem:[#allocation4 + $0x90] sm:$0xf]
    %v178 = vld [vmem:[#allocation4 + $0x94] sm:$0xf]
    %v179 = vld [vmem:[#allocation4 + $0x98] sm:$0xf]
    %v180 = vld [vmem:[#allocation4 + $0x9c] sm:$0xf]
    %v181 = vld [vmem:[#allocation4 + $0xa0] sm:$0xf]
    %v182 = vld [vmem:[#allocation4 + $0xa4] sm:$0xf]
    %v183 = vld [vmem:[#allocation4 + $0xa8] sm:$0xf]
    %v184 = vld [vmem:[#allocation4 + $0xac] sm:$0xf]
    %v185 = vld [vmem:[#allocation4 + $0xb0] sm:$0xf]
    %v186 = vld [vmem:[#allocation4 + $0xb4] sm:$0xf]
    %v187 = vld [vmem:[#allocation4 + $0xb8] sm:$0xf]
    %v188 = vld [vmem:[#allocation4 + $0xbc] sm:$0xf]
    %v189 = vld [vmem:[%s2] sm:$0x1]
    %v191 = vlaneseq
    %v192 = vshrl.u32 %v191, 7
    %v193 = vsub.s32 0, %v192
    %v194 = vrot.slane %v189, %v193
    %v244 = vunpack.c.l.b16 %v141
    %v245 = vunpack.c.l.b16 %v142
    %v246 = vunpack.c.l.b16 %v143
    %v247 = vunpack.c.l.b16 %v144
    %v248 = vunpack.c.l.b16 %v145
    %v249 = vunpack.c.l.b16 %v146
    %v250 = vunpack.c.l.b16 %v147
    %v251 = vunpack.c.l.b16 %v148
    %v252 = vunpack.c.l.b16 %v149
    %v253 = vunpack.c.l.b16 %v150
    %v254 = vunpack.c.l.b16 %v151
    %v255 = vunpack.c.l.b16 %v152
    %v256 = vunpack.c.l.b16 %v153
    %v257 = vunpack.c.l.b16 %v154
    %v258 = vunpack.c.l.b16 %v155
    %v259 = vunpack.c.l.b16 %v156
    %v260 = vunpack.c.l.b16 %v157
    %v261 = vunpack.c.l.b16 %v158
    %v262 = vunpack.c.l.b16 %v159
    %v263 = vunpack.c.l.b16 %v160
    %v264 = vunpack.c.l.b16 %v161
    %v265 = vunpack.c.l.b16 %v162
    %v266 = vunpack.c.l.b16 %v163
    %v267 = vunpack.c.l.b16 %v164
    %v268 = vunpack.c.l.b16 %v165
    %v269 = vunpack.c.l.b16 %v166
    %v270 = vunpack.c.l.b16 %v167
    %v271 = vunpack.c.l.b16 %v168
    %v272 = vunpack.c.l.b16 %v169
    %v273 = vunpack.c.l.b16 %v170
    %v274 = vunpack.c.l.b16 %v171
    %v275 = vunpack.c.l.b16 %v172
    %v276 = vunpack.c.l.b16 %v173
    %v277 = vunpack.c.l.b16 %v174
    %v278 = vunpack.c.l.b16 %v175
    %v279 = vunpack.c.l.b16 %v176
    %v280 = vunpack.c.l.b16 %v177
    %v281 = vunpack.c.l.b16 %v178
    %v282 = vunpack.c.l.b16 %v179
    %v283 = vunpack.c.l.b16 %v180
    %v284 = vunpack.c.l.b16 %v181
    %v285 = vunpack.c.l.b16 %v182
    %v286 = vunpack.c.l.b16 %v183
    %v287 = vunpack.c.l.b16 %v184
    %v288 = vunpack.c.l.b16 %v185
    %v289 = vunpack.c.l.b16 %v186
    %v290 = vunpack.c.l.b16 %v187
    %v291 = vunpack.c.l.b16 %v188
    %v292 = vpack.c.b16 %v245, %v244
    %v293 = vpack.c.b16 %v247, %v246
    %v294 = vpack.c.b16 %v249, %v248
    %v295 = vpack.c.b16 %v251, %v250
    %v296 = vpack.c.b16 %v253, %v252
    %v297 = vpack.c.b16 %v255, %v254
    %v298 = vpack.c.b16 %v257, %v256
    %v299 = vpack.c.b16 %v259, %v258
    %v300 = vpack.c.b16 %v261, %v260
    %v301 = vpack.c.b16 %v263, %v262
    %v302 = vpack.c.b16 %v265, %v264
    %v303 = vpack.c.b16 %v267, %v266
    %v304 = vpack.c.b16 %v269, %v268
    %v305 = vpack.c.b16 %v271, %v270
    %v306 = vpack.c.b16 %v273, %v272
    %v307 = vpack.c.b16 %v275, %v274
    %v308 = vpack.c.b16 %v277, %v276
    %v309 = vpack.c.b16 %v279, %v278
    %v310 = vpack.c.b16 %v281, %v280
    %v311 = vpack.c.b16 %v283, %v282
    %v312 = vpack.c.b16 %v285, %v284
    %v313 = vpack.c.b16 %v287, %v286
    %v314 = vpack.c.b16 %v289, %v288
    %v315 = vpack.c.b16 %v291, %v290
    %340 = vmatprep.subr.bf16.mxu0 0
    %341 = vmatpush1.bf16.msra.mxu0 %v292
    %342 = vmatprep.subr.bf16.mxu0 0
    %343 = vmatpush1.bf16.msra.mxu0 %v293
    %344 = vmatprep.subr.bf16.mxu0 0
    %345 = vmatpush1.bf16.msra.mxu0 %v294
    %346 = vmatprep.subr.bf16.mxu0 0
    %347 = vmatpush1.bf16.msra.mxu0 %v295
    %348 = vmatprep.subr.bf16.mxu0 0
    %349 = vmatpush1.bf16.msra.mxu0 %v296
    %350 = vmatprep.subr.bf16.mxu0 0
    %351 = vmatpush1.bf16.msra.mxu0 %v297
    %352 = vmatprep.subr.bf16.mxu0 0
    %353 = vmatpush1.bf16.msra.mxu0 %v298
    %354 = vmatprep.subr.bf16.mxu0 0
    %355 = vmatpush1.bf16.msra.mxu0 %v299
    %356 = vmatprep.subr.bf16.mxu0 0
    %357 = vmatpush1.bf16.msra.mxu0 %v300
    %358 = vmatprep.subr.bf16.mxu0 0
    %359 = vmatpush1.bf16.msra.mxu0 %v301
    %360 = vmatprep.subr.bf16.mxu0 0
    %361 = vmatpush1.bf16.msra.mxu0 %v302
    %362 = vmatprep.subr.bf16.mxu0 0
    %363 = vmatpush1.bf16.msra.mxu0 %v303
    %364 = vmatprep.subr.bf16.mxu0 0
    %365 = vmatpush1.bf16.msra.mxu0 %v304
    %366 = vmatprep.subr.bf16.mxu0 0
    %367 = vmatpush1.bf16.msra.mxu0 %v305
    %368 = vmatprep.subr.bf16.mxu0 0
    %369 = vmatpush1.bf16.msra.mxu0 %v306
    %370 = vmatprep.subr.bf16.mxu0 0
    %371 = vmatpush1.bf16.msra.mxu0 %v307
    %372 = vmatprep.mubr.bf16.mxu0 %v137
    %373 = vmatmul.mubr.bf16.gmra.mrb[0].mxu0 %v135
    %v374 = vpop.f32.mrb[0].mxu0
    %v375 = vadd.f32 %v194, %v374
    %v376 = vpop.f32.mrb[0].mxu0
    %v377 = vpop.f32.mrb[0].mxu0
    %v378 = vadd.f32 %v194, %v377
    %v379 = vpop.f32.mrb[0].mxu0
    %380 = vmatprep.mubr.bf16.mxu0 %v138
    %381 = vmatmul.mubr.bf16.gmra.mrb[0].mxu0 %v136
    %v382 = vpop.f32.mrb[0].mxu0
    %v383 = vadd.f32 %v194, %v382
    %v384 = vpop.f32.mrb[0].mxu0
    %v385 = vpop.f32.mrb[0].mxu0
    %v386 = vadd.f32 %v194, %v385
    %v387 = vpop.f32.mrb[0].mxu0
    %388 = vdwg.mxu0
    %389 = vmatprep.subr.bf16.mxu0 0
    %390 = vmatpush1.bf16.msra.mxu0 %v308
    %391 = vmatprep.subr.bf16.mxu0 0
    %392 = vmatpush1.bf16.msra.mxu0 %v309
    %393 = vmatprep.subr.bf16.mxu0 0
    %394 = vmatpush1.bf16.msra.mxu0 %v310
    %395 = vmatprep.subr.bf16.mxu0 0
    %396 = vmatpush1.bf16.msra.mxu0 %v311
    %397 = vmatprep.subr.bf16.mxu0 0
    %398 = vmatpush1.bf16.msra.mxu0 %v312
    %399 = vmatprep.subr.bf16.mxu0 0
    %400 = vmatpush1.bf16.msra.mxu0 %v313
    %401 = vmatprep.subr.bf16.mxu0 0
    %402 = vmatpush1.bf16.msra.mxu0 %v314
    %403 = vmatprep.subr.bf16.mxu0 0
    %404 = vmatpush1.bf16.msra.mxu0 %v315
    %405 = vmatprep.subr.bf16.mxu0 0
    %406 = vmatpush1.bf16.msra.mxu0 0
    %407 = vmatprep.subr.bf16.mxu0 0
    %408 = vmatpush1.bf16.msra.mxu0 0
    %409 = vmatprep.subr.bf16.mxu0 0
    %410 = vmatpush1.bf16.msra.mxu0 0
    %411 = vmatprep.subr.bf16.mxu0 0
    %412 = vmatpush1.bf16.msra.mxu0 0
    %413 = vmatprep.subr.bf16.mxu0 0
    %414 = vmatpush1.bf16.msra.mxu0 0
    %415 = vmatprep.subr.bf16.mxu0 0
    %416 = vmatpush1.bf16.msra.mxu0 0
    %417 = vmatprep.subr.bf16.mxu0 0
    %418 = vmatpush1.bf16.msra.mxu0 0
    %419 = vmatprep.subr.bf16.mxu0 0
    %420 = vmatpush1.bf16.msra.mxu0 0
    %421 = vmatprep.mubr.bf16.mxu0 0
    %422 = vmatmul.mubr.bf16.gmra.mrb[0].mxu0 %v139
    %v423 = vpop.f32.mrb[0].mxu0
    %v424 = vadd.f32 %v375, %v423
    %v425 = vpop.f32.mrb[0].mxu0
    %v426 = vpop.f32.mrb[0].mxu0
    %v427 = vadd.f32 %v378, %v426
    %v428 = vpop.f32.mrb[0].mxu0
    %429 = vmatprep.mubr.bf16.mxu0 0
    %430 = vmatmul.mubr.bf16.gmra.mrb[0].mxu0 %v140
    %v431 = vpop.f32.mrb[0].mxu0
    %v432 = vadd.f32 %v383, %v431
    %v433 = vpop.f32.mrb[0].mxu0
    %v434 = vpop.f32.mrb[0].mxu0
    %v435 = vadd.f32 %v386, %v434
    %v436 = vpop.f32.mrb[0].mxu0
    %437 = vdwg.mxu0
    %v438 = vmax.f32 %v424, 0.0
    %v439 = vmax.f32 %v427, 0.0
    %v440 = vmax.f32 %v432, 0.0
    %v441 = vmax.f32 %v435, 0.0
    %442 = vst [vmem:[#allocation3 + $0x1] sm:$0xff] %v438
    %443 = vst [vmem:[#allocation3 + $0x9] sm:$0xff] %v439
    %444 = vst [vmem:[#allocation3 + $0x11] sm:$0xff] %v440
    %445 = vst [vmem:[#allocation3 + $0x19] sm:$0xff] %v441
    %v446 = vld [vmem:[#allocation3 + $0x1] sm:$0xff]
    %v447 = vld [vmem:[#allocation3 + $0x9] sm:$0xff]
    %v448 = vld [vmem:[#allocation3 + $0x11] sm:$0xff]
    %v449 = vld [vmem:[#allocation3 + $0x19] sm:$0xff]
    %v450 = vld [vmem:[#allocation3] sm:$0xff]
    %v451 = vld [vmem:[#allocation3 + $0x8] sm:$0xff]
    %v452 = vld [vmem:[#allocation3 + $0x10] sm:$0xff]
    %v453 = vld [vmem:[#allocation3 + $0x18] sm:$0xff]
    %v454 = vsel %vm111, 0.0, %v450
    %v455 = vsel %vm112, 0.0, %v451
    %v456 = vsel %vm113, 0.0, %v452
    %v457 = vsel %vm114, 0.0, %v453
    %v458 = vld [vmem:[#allocation3 + $0x2] sm:$0xff]
    %v459 = vld [vmem:[#allocation3 + $0xa] sm:$0xff]
    %v460 = vld [vmem:[#allocation3 + $0x12] sm:$0xff]
    %v461 = vld [vmem:[#allocation3 + $0x1a] sm:$0xff]
    %v462 = vsel %vm123, 0.0, %v458
    %v463 = vsel %vm124, 0.0, %v459
    %v464 = vsel %vm125, 0.0, %v460
    %v465 = vsel %vm126, 0.0, %v461
    %v466 = vpack.c.bf16 %v455, %v454
    %v467 = vpack.c.bf16 %v457, %v456
    %v468 = vpack.c.bf16 %v447, %v446
    %v469 = vpack.c.bf16 %v449, %v448
    %v470 = vpack.c.bf16 %v463, %v462
    %v471 = vpack.c.bf16 %v465, %v464
    %s472 = scalar_lea.vmem [#allocation4], 192
    %v473 = vld [vmem:[%s472] sm:$0xf]
    %v474 = vld [vmem:[%s472 + $0x4] sm:$0xf]
    %v475 = vld [vmem:[%s472 + $0x8] sm:$0xf]
    %v476 = vld [vmem:[%s472 + $0xc] sm:$0xf]
    %v477 = vld [vmem:[%s472 + $0x10] sm:$0xf]
    %v478 = vld [vmem:[%s472 + $0x14] sm:$0xf]
    %v479 = vld [vmem:[%s472 + $0x18] sm:$0xf]
    %v480 = vld [vmem:[%s472 + $0x1c] sm:$0xf]
    %v481 = vld [vmem:[%s472 + $0x20] sm:$0xf]
    %v482 = vld [vmem:[%s472 + $0x24] sm:$0xf]
    %v483 = vld [vmem:[%s472 + $0x28] sm:$0xf]
    %v484 = vld [vmem:[%s472 + $0x2c] sm:$0xf]
    %v485 = vld [vmem:[%s472 + $0x30] sm:$0xf]
    %v486 = vld [vmem:[%s472 + $0x34] sm:$0xf]
    %v487 = vld [vmem:[%s472 + $0x38] sm:$0xf]
    %v488 = vld [vmem:[%s472 + $0x3c] sm:$0xf]
    %v489 = vld [vmem:[%s472 + $0x40] sm:$0xf]
    %v490 = vld [vmem:[%s472 + $0x44] sm:$0xf]
    %v491 = vld [vmem:[%s472 + $0x48] sm:$0xf]
    %v492 = vld [vmem:[%s472 + $0x4c] sm:$0xf]
    %v493 = vld [vmem:[%s472 + $0x50] sm:$0xf]
    %v494 = vld [vmem:[%s472 + $0x54] sm:$0xf]
    %v495 = vld [vmem:[%s472 + $0x58] sm:$0xf]
    %v496 = vld [vmem:[%s472 + $0x5c] sm:$0xf]
    %v497 = vld [vmem:[%s472 + $0x60] sm:$0xf]
    %v498 = vld [vmem:[%s472 + $0x64] sm:$0xf]
    %v499 = vld [vmem:[%s472 + $0x68] sm:$0xf]
    %v500 = vld [vmem:[%s472 + $0x6c] sm:$0xf]
    %v501 = vld [vmem:[%s472 + $0x70] sm:$0xf]
    %v502 = vld [vmem:[%s472 + $0x74] sm:$0xf]
    %v503 = vld [vmem:[%s472 + $0x78] sm:$0xf]
    %v504 = vld [vmem:[%s472 + $0x7c] sm:$0xf]
    %v505 = vld [vmem:[%s472 + $0x80] sm:$0xf]
    %v506 = vld [vmem:[%s472 + $0x84] sm:$0xf]
    %v507 = vld [vmem:[%s472 + $0x88] sm:$0xf]
    %v508 = vld [vmem:[%s472 + $0x8c] sm:$0xf]
    %v509 = vld [vmem:[%s472 + $0x90] sm:$0xf]
    %v510 = vld [vmem:[%s472 + $0x94] sm:$0xf]
    %v511 = vld [vmem:[%s472 + $0x98] sm:$0xf]
    %v512 = vld [vmem:[%s472 + $0x9c] sm:$0xf]
    %v513 = vld [vmem:[%s472 + $0xa0] sm:$0xf]
    %v514 = vld [vmem:[%s472 + $0xa4] sm:$0xf]
    %v515 = vld [vmem:[%s472 + $0xa8] sm:$0xf]
    %v516 = vld [vmem:[%s472 + $0xac] sm:$0xf]
    %v517 = vld [vmem:[%s472 + $0xb0] sm:$0xf]
    %v518 = vld [vmem:[%s472 + $0xb4] sm:$0xf]
    %v519 = vld [vmem:[%s472 + $0xb8] sm:$0xf]
    %v520 = vld [vmem:[%s472 + $0xbc] sm:$0xf]
    %s521 = scalar_lea.vmem %s2, 1
    %v522 = vld [vmem:[%s521] sm:$0x1]
    %v524 = vlaneseq
    %v525 = vshrl.u32 %v524, 7
    %v526 = vsub.s32 0, %v525
    %v527 = vrot.slane %v522, %v526
    %v577 = vunpack.c.l.b16 %v473
    %v578 = vunpack.c.l.b16 %v474
    %v579 = vunpack.c.l.b16 %v475
    %v580 = vunpack.c.l.b16 %v476
    %v581 = vunpack.c.l.b16 %v477
    %v582 = vunpack.c.l.b16 %v478
    %v583 = vunpack.c.l.b16 %v479
    %v584 = vunpack.c.l.b16 %v480
    %v585 = vunpack.c.l.b16 %v481
    %v586 = vunpack.c.l.b16 %v482
    %v587 = vunpack.c.l.b16 %v483
    %v588 = vunpack.c.l.b16 %v484
    %v589 = vunpack.c.l.b16 %v485
    %v590 = vunpack.c.l.b16 %v486
    %v591 = vunpack.c.l.b16 %v487
    %v592 = vunpack.c.l.b16 %v488
    %v593 = vunpack.c.l.b16 %v489
    %v594 = vunpack.c.l.b16 %v490
    %v595 = vunpack.c.l.b16 %v491
    %v596 = vunpack.c.l.b16 %v492
    %v597 = vunpack.c.l.b16 %v493
    %v598 = vunpack.c.l.b16 %v494
    %v599 = vunpack.c.l.b16 %v495
    %v600 = vunpack.c.l.b16 %v496
    %v601 = vunpack.c.l.b16 %v497
    %v602 = vunpack.c.l.b16 %v498
    %v603 = vunpack.c.l.b16 %v499
    %v604 = vunpack.c.l.b16 %v500
    %v605 = vunpack.c.l.b16 %v501
    %v606 = vunpack.c.l.b16 %v502
    %v607 = vunpack.c.l.b16 %v503
    %v608 = vunpack.c.l.b16 %v504
    %v609 = vunpack.c.l.b16 %v505
    %v610 = vunpack.c.l.b16 %v506
    %v611 = vunpack.c.l.b16 %v507
    %v612 = vunpack.c.l.b16 %v508
    %v613 = vunpack.c.l.b16 %v509
    %v614 = vunpack.c.l.b16 %v510
    %v615 = vunpack.c.l.b16 %v511
    %v616 = vunpack.c.l.b16 %v512
    %v617 = vunpack.c.l.b16 %v513
    %v618 = vunpack.c.l.b16 %v514
    %v619 = vunpack.c.l.b16 %v515
    %v620 = vunpack.c.l.b16 %v516
    %v621 = vunpack.c.l.b16 %v517
    %v622 = vunpack.c.l.b16 %v518
    %v623 = vunpack.c.l.b16 %v519
    %v624 = vunpack.c.l.b16 %v520
    %v625 = vpack.c.b16 %v578, %v577
    %v626 = vpack.c.b16 %v580, %v579
    %v627 = vpack.c.b16 %v582, %v581
    %v628 = vpack.c.b16 %v584, %v583
    %v629 = vpack.c.b16 %v586, %v585
    %v630 = vpack.c.b16 %v588, %v587
    %v631 = vpack.c.b16 %v590, %v589
    %v632 = vpack.c.b16 %v592, %v591
    %v633 = vpack.c.b16 %v594, %v593
    %v634 = vpack.c.b16 %v596, %v595
    %v635 = vpack.c.b16 %v598, %v597
    %v636 = vpack.c.b16 %v600, %v599
    %v637 = vpack.c.b16 %v602, %v601
    %v638 = vpack.c.b16 %v604, %v603
    %v639 = vpack.c.b16 %v606, %v605
    %v640 = vpack.c.b16 %v608, %v607
    %v641 = vpack.c.b16 %v610, %v609
    %v642 = vpack.c.b16 %v612, %v611
    %v643 = vpack.c.b16 %v614, %v613
    %v644 = vpack.c.b16 %v616, %v615
    %v645 = vpack.c.b16 %v618, %v617
    %v646 = vpack.c.b16 %v620, %v619
    %v647 = vpack.c.b16 %v622, %v621
    %v648 = vpack.c.b16 %v624, %v623
    %673 = vmatprep.subr.bf16.mxu0 0
    %674 = vmatpush1.bf16.msra.mxu0 %v625
    %675 = vmatprep.subr.bf16.mxu0 0
    %676 = vmatpush1.bf16.msra.mxu0 %v626
    %677 = vmatprep.subr.bf16.mxu0 0
    %678 = vmatpush1.bf16.msra.mxu0 %v627
    %679 = vmatprep.subr.bf16.mxu0 0
    %680 = vmatpush1.bf16.msra.mxu0 %v628
    %681 = vmatprep.subr.bf16.mxu0 0
    %682 = vmatpush1.bf16.msra.mxu0 %v629
    %683 = vmatprep.subr.bf16.mxu0 0
    %684 = vmatpush1.bf16.msra.mxu0 %v630
    %685 = vmatprep.subr.bf16.mxu0 0
    %686 = vmatpush1.bf16.msra.mxu0 %v631
    %687 = vmatprep.subr.bf16.mxu0 0
    %688 = vmatpush1.bf16.msra.mxu0 %v632
    %689 = vmatprep.subr.bf16.mxu0 0
    %690 = vmatpush1.bf16.msra.mxu0 %v633
    %691 = vmatprep.subr.bf16.mxu0 0
    %692 = vmatpush1.bf16.msra.mxu0 %v634
    %693 = vmatprep.subr.bf16.mxu0 0
    %694 = vmatpush1.bf16.msra.mxu0 %v635
    %695 = vmatprep.subr.bf16.mxu0 0
    %696 = vmatpush1.bf16.msra.mxu0 %v636
    %697 = vmatprep.subr.bf16.mxu0 0
    %698 = vmatpush1.bf16.msra.mxu0 %v637
    %699 = vmatprep.subr.bf16.mxu0 0
    %700 = vmatpush1.bf16.msra.mxu0 %v638
    %701 = vmatprep.subr.bf16.mxu0 0
    %702 = vmatpush1.bf16.msra.mxu0 %v639
    %703 = vmatprep.subr.bf16.mxu0 0
    %704 = vmatpush1.bf16.msra.mxu0 %v640
    %705 = vmatprep.mubr.bf16.mxu0 %v468
    %706 = vmatmul.mubr.bf16.gmra.mrb[0].mxu0 %v466
    %v707 = vpop.f32.mrb[0].mxu0
    %v708 = vadd.f32 %v527, %v707
    %v709 = vpop.f32.mrb[0].mxu0
    %v710 = vpop.f32.mrb[0].mxu0
    %v711 = vadd.f32 %v527, %v710
    %v712 = vpop.f32.mrb[0].mxu0
    %713 = vmatprep.mubr.bf16.mxu0 %v469
    %714 = vmatmul.mubr.bf16.gmra.mrb[0].mxu0 %v467
    %v715 = vpop.f32.mrb[0].mxu0
    %v716 = vadd.f32 %v527, %v715
    %v717 = vpop.f32.mrb[0].mxu0
    %v718 = vpop.f32.mrb[0].mxu0
    %v719 = vadd.f32 %v527, %v718
    %v720 = vpop.f32.mrb[0].mxu0
    %721 = vdwg.mxu0
    %722 = vmatprep.subr.bf16.mxu0 0
    %723 = vmatpush1.bf16.msra.mxu0 %v641
    %724 = vmatprep.subr.bf16.mxu0 0
    %725 = vmatpush1.bf16.msra.mxu0 %v642
    %726 = vmatprep.subr.bf16.mxu0 0
    %727 = vmatpush1.bf16.msra.mxu0 %v643
    %728 = vmatprep.subr.bf16.mxu0 0
    %729 = vmatpush1.bf16.msra.mxu0 %v644
    %730 = vmatprep.subr.bf16.mxu0 0
    %731 = vmatpush1.bf16.msra.mxu0 %v645
    %732 = vmatprep.subr.bf16.mxu0 0
    %733 = vmatpush1.bf16.msra.mxu0 %v646
    %734 = vmatprep.subr.bf16.mxu0 0
    %735 = vmatpush1.bf16.msra.mxu0 %v647
    %736 = vmatprep.subr.bf16.mxu0 0
    %737 = vmatpush1.bf16.msra.mxu0 %v648
    %738 = vmatprep.subr.bf16.mxu0 0
    %739 = vmatpush1.bf16.msra.mxu0 0
    %740 = vmatprep.subr.bf16.mxu0 0
    %741 = vmatpush1.bf16.msra.mxu0 0
    %742 = vmatprep.subr.bf16.mxu0 0
    %743 = vmatpush1.bf16.msra.mxu0 0
    %744 = vmatprep.subr.bf16.mxu0 0
    %745 = vmatpush1.bf16.msra.mxu0 0
    %746 = vmatprep.subr.bf16.mxu0 0
    %747 = vmatpush1.bf16.msra.mxu0 0
    %748 = vmatprep.subr.bf16.mxu0 0
    %749 = vmatpush1.bf16.msra.mxu0 0
    %750 = vmatprep.subr.bf16.mxu0 0
    %751 = vmatpush1.bf16.msra.mxu0 0
    %752 = vmatprep.subr.bf16.mxu0 0
    %753 = vmatpush1.bf16.msra.mxu0 0
    %754 = vmatprep.mubr.bf16.mxu0 0
    %755 = vmatmul.mubr.bf16.gmra.mrb[0].mxu0 %v470
    %v756 = vpop.f32.mrb[0].mxu0
    %v757 = vadd.f32 %v708, %v756
    %v758 = vpop.f32.mrb[0].mxu0
    %v759 = vpop.f32.mrb[0].mxu0
    %v760 = vadd.f32 %v711, %v759
    %v761 = vpop.f32.mrb[0].mxu0
    %762 = vmatprep.mubr.bf16.mxu0 0
    %763 = vmatmul.mubr.bf16.gmra.mrb[0].mxu0 %v471
    %v764 = vpop.f32.mrb[0].mxu0
    %v765 = vadd.f32 %v716, %v764
    %v766 = vpop.f32.mrb[0].mxu0
    %v767 = vpop.f32.mrb[0].mxu0
    %v768 = vadd.f32 %v719, %v767
    %v769 = vpop.f32.mrb[0].mxu0
    %770 = vdwg.mxu0
    %v771 = vmax.f32 %v757, 0.0
    %v772 = vmax.f32 %v760, 0.0
    %v773 = vmax.f32 %v765, 0.0
    %v774 = vmax.f32 %v768, 0.0
    %775 = vst [vmem:[#allocation2 + $0x1] sm:$0xff] %v771
    %776 = vst [vmem:[#allocation2 + $0x9] sm:$0xff] %v772
    %777 = vst [vmem:[#allocation2 + $0x11] sm:$0xff] %v773
    %778 = vst [vmem:[#allocation2 + $0x19] sm:$0xff] %v774
    %v779 = vld [vmem:[#allocation2 + $0x1] sm:$0xff]
    %v780 = vld [vmem:[#allocation2 + $0x9] sm:$0xff]
    %v781 = vld [vmem:[#allocation2 + $0x11] sm:$0xff]
    %v782 = vld [vmem:[#allocation2 + $0x19] sm:$0xff]
    %v783 = vld [vmem:[#allocation2] sm:$0xff]
    %v784 = vld [vmem:[#allocation2 + $0x8] sm:$0xff]
    %v785 = vld [vmem:[#allocation2 + $0x10] sm:$0xff]
    %v786 = vld [vmem:[#allocation2 + $0x18] sm:$0xff]
    %v787 = vsel %vm111, 0.0, %v783
    %v788 = vsel %vm112, 0.0, %v784
    %v789 = vsel %vm113, 0.0, %v785
    %v790 = vsel %vm114, 0.0, %v786
    %v791 = vld [vmem:[#allocation2 + $0x2] sm:$0xff]
    %v792 = vld [vmem:[#allocation2 + $0xa] sm:$0xff]
    %v793 = vld [vmem:[#allocation2 + $0x12] sm:$0xff]
    %v794 = vld [vmem:[#allocation2 + $0x1a] sm:$0xff]
    %v795 = vsel %vm123, 0.0, %v791
    %v796 = vsel %vm124, 0.0, %v792
    %v797 = vsel %vm125, 0.0, %v793
    %v798 = vsel %vm126, 0.0, %v794
    %v799 = vpack.c.bf16 %v788, %v787
    %v800 = vpack.c.bf16 %v790, %v789
    %v801 = vpack.c.bf16 %v780, %v779
    %v802 = vpack.c.bf16 %v782, %v781
    %v803 = vpack.c.bf16 %v796, %v795
    %v804 = vpack.c.bf16 %v798, %v797
    %s805 = scalar_lea.vmem [#allocation4], 384
    %v806 = vld [vmem:[%s805] sm:$0xf]
    %v807 = vld [vmem:[%s805 + $0x4] sm:$0xf]
    %v808 = vld [vmem:[%s805 + $0x8] sm:$0xf]
    %v809 = vld [vmem:[%s805 + $0xc] sm:$0xf]
    %v810 = vld [vmem:[%s805 + $0x10] sm:$0xf]
    %v811 = vld [vmem:[%s805 + $0x14] sm:$0xf]
    %v812 = vld [vmem:[%s805 + $0x18] sm:$0xf]
    %v813 = vld [vmem:[%s805 + $0x1c] sm:$0xf]
    %v814 = vld [vmem:[%s805 + $0x20] sm:$0xf]
    %v815 = vld [vmem:[%s805 + $0x24] sm:$0xf]
    %v816 = vld [vmem:[%s805 + $0x28] sm:$0xf]
    %v817 = vld [vmem:[%s805 + $0x2c] sm:$0xf]
    %v818 = vld [vmem:[%s805 + $0x30] sm:$0xf]
    %v819 = vld [vmem:[%s805 + $0x34] sm:$0xf]
    %v820 = vld [vmem:[%s805 + $0x38] sm:$0xf]
    %v821 = vld [vmem:[%s805 + $0x3c] sm:$0xf]
    %v822 = vld [vmem:[%s805 + $0x40] sm:$0xf]
    %v823 = vld [vmem:[%s805 + $0x44] sm:$0xf]
    %v824 = vld [vmem:[%s805 + $0x48] sm:$0xf]
    %v825 = vld [vmem:[%s805 + $0x4c] sm:$0xf]
    %v826 = vld [vmem:[%s805 + $0x50] sm:$0xf]
    %v827 = vld [vmem:[%s805 + $0x54] sm:$0xf]
    %v828 = vld [vmem:[%s805 + $0x58] sm:$0xf]
    %v829 = vld [vmem:[%s805 + $0x5c] sm:$0xf]
    %v830 = vld [vmem:[%s805 + $0x60] sm:$0xf]
    %v831 = vld [vmem:[%s805 + $0x64] sm:$0xf]
    %v832 = vld [vmem:[%s805 + $0x68] sm:$0xf]
    %v833 = vld [vmem:[%s805 + $0x6c] sm:$0xf]
    %v834 = vld [vmem:[%s805 + $0x70] sm:$0xf]
    %v835 = vld [vmem:[%s805 + $0x74] sm:$0xf]
    %v836 = vld [vmem:[%s805 + $0x78] sm:$0xf]
    %v837 = vld [vmem:[%s805 + $0x7c] sm:$0xf]
    %v838 = vld [vmem:[%s805 + $0x80] sm:$0xf]
    %v839 = vld [vmem:[%s805 + $0x84] sm:$0xf]
    %v840 = vld [vmem:[%s805 + $0x88] sm:$0xf]
    %v841 = vld [vmem:[%s805 + $0x8c] sm:$0xf]
    %v842 = vld [vmem:[%s805 + $0x90] sm:$0xf]
    %v843 = vld [vmem:[%s805 + $0x94] sm:$0xf]
    %v844 = vld [vmem:[%s805 + $0x98] sm:$0xf]
    %v845 = vld [vmem:[%s805 + $0x9c] sm:$0xf]
    %v846 = vld [vmem:[%s805 + $0xa0] sm:$0xf]
    %v847 = vld [vmem:[%s805 + $0xa4] sm:$0xf]
    %v848 = vld [vmem:[%s805 + $0xa8] sm:$0xf]
    %v849 = vld [vmem:[%s805 + $0xac] sm:$0xf]
    %v850 = vld [vmem:[%s805 + $0xb0] sm:$0xf]
    %v851 = vld [vmem:[%s805 + $0xb4] sm:$0xf]
    %v852 = vld [vmem:[%s805 + $0xb8] sm:$0xf]
    %v853 = vld [vmem:[%s805 + $0xbc] sm:$0xf]
    %s854 = scalar_lea.vmem %s2, 2
    %v855 = vld [vmem:[%s854] sm:$0x1]
    %v857 = vlaneseq
    %v858 = vshrl.u32 %v857, 7
    %v859 = vsub.s32 0, %v858
    %v860 = vrot.slane %v855, %v859
    %v910 = vunpack.c.l.b16 %v806
    %v911 = vunpack.c.l.b16 %v807
    %v912 = vunpack.c.l.b16 %v808
    %v913 = vunpack.c.l.b16 %v809
    %v914 = vunpack.c.l.b16 %v810
    %v915 = vunpack.c.l.b16 %v811
    %v916 = vunpack.c.l.b16 %v812
    %v917 = vunpack.c.l.b16 %v813
    %v918 = vunpack.c.l.b16 %v814
    %v919 = vunpack.c.l.b16 %v815
    %v920 = vunpack.c.l.b16 %v816
    %v921 = vunpack.c.l.b16 %v817
    %v922 = vunpack.c.l.b16 %v818
    %v923 = vunpack.c.l.b16 %v819
    %v924 = vunpack.c.l.b16 %v820
    %v925 = vunpack.c.l.b16 %v821
    %v926 = vunpack.c.l.b16 %v822
    %v927 = vunpack.c.l.b16 %v823
    %v928 = vunpack.c.l.b16 %v824
    %v929 = vunpack.c.l.b16 %v825
    %v930 = vunpack.c.l.b16 %v826
    %v931 = vunpack.c.l.b16 %v827
    %v932 = vunpack.c.l.b16 %v828
    %v933 = vunpack.c.l.b16 %v829
    %v934 = vunpack.c.l.b16 %v830
    %v935 = vunpack.c.l.b16 %v831
    %v936 = vunpack.c.l.b16 %v832
    %v937 = vunpack.c.l.b16 %v833
    %v938 = vunpack.c.l.b16 %v834
    %v939 = vunpack.c.l.b16 %v835
    %v940 = vunpack.c.l.b16 %v836
    %v941 = vunpack.c.l.b16 %v837
    %v942 = vunpack.c.l.b16 %v838
    %v943 = vunpack.c.l.b16 %v839
    %v944 = vunpack.c.l.b16 %v840
    %v945 = vunpack.c.l.b16 %v841
    %v946 = vunpack.c.l.b16 %v842
    %v947 = vunpack.c.l.b16 %v843
    %v948 = vunpack.c.l.b16 %v844
    %v949 = vunpack.c.l.b16 %v845
    %v950 = vunpack.c.l.b16 %v846
    %v951 = vunpack.c.l.b16 %v847
    %v952 = vunpack.c.l.b16 %v848
    %v953 = vunpack.c.l.b16 %v849
    %v954 = vunpack.c.l.b16 %v850
    %v955 = vunpack.c.l.b16 %v851
    %v956 = vunpack.c.l.b16 %v852
    %v957 = vunpack.c.l.b16 %v853
    %v958 = vpack.c.b16 %v911, %v910
    %v959 = vpack.c.b16 %v913, %v912
    %v960 = vpack.c.b16 %v915, %v914
    %v961 = vpack.c.b16 %v917, %v916
    %v962 = vpack.c.b16 %v919, %v918
    %v963 = vpack.c.b16 %v921, %v920
    %v964 = vpack.c.b16 %v923, %v922
    %v965 = vpack.c.b16 %v925, %v924
    %v966 = vpack.c.b16 %v927, %v926
    %v967 = vpack.c.b16 %v929, %v928
    %v968 = vpack.c.b16 %v931, %v930
    %v969 = vpack.c.b16 %v933, %v932
    %v970 = vpack.c.b16 %v935, %v934
    %v971 = vpack.c.b16 %v937, %v936
    %v972 = vpack.c.b16 %v939, %v938
    %v973 = vpack.c.b16 %v941, %v940
    %v974 = vpack.c.b16 %v943, %v942
    %v975 = vpack.c.b16 %v945, %v944
    %v976 = vpack.c.b16 %v947, %v946
    %v977 = vpack.c.b16 %v949, %v948
    %v978 = vpack.c.b16 %v951, %v950
    %v979 = vpack.c.b16 %v953, %v952
    %v980 = vpack.c.b16 %v955, %v954
    %v981 = vpack.c.b16 %v957, %v956
    %1006 = vmatprep.subr.bf16.mxu0 0
    %1007 = vmatpush1.bf16.msra.mxu0 %v958
    %1008 = vmatprep.subr.bf16.mxu0 0
    %1009 = vmatpush1.bf16.msra.mxu0 %v959
    %1010 = vmatprep.subr.bf16.mxu0 0
    %1011 = vmatpush1.bf16.msra.mxu0 %v960
    %1012 = vmatprep.subr.bf16.mxu0 0
    %1013 = vmatpush1.bf16.msra.mxu0 %v961
    %1014 = vmatprep.subr.bf16.mxu0 0
    %1015 = vmatpush1.bf16.msra.mxu0 %v962
    %1016 = vmatprep.subr.bf16.mxu0 0
    %1017 = vmatpush1.bf16.msra.mxu0 %v963
    %1018 = vmatprep.subr.bf16.mxu0 0
    %1019 = vmatpush1.bf16.msra.mxu0 %v964
    %1020 = vmatprep.subr.bf16.mxu0 0
    %1021 = vmatpush1.bf16.msra.mxu0 %v965
    %1022 = vmatprep.subr.bf16.mxu0 0
    %1023 = vmatpush1.bf16.msra.mxu0 %v966
    %1024 = vmatprep.subr.bf16.mxu0 0
    %1025 = vmatpush1.bf16.msra.mxu0 %v967
    %1026 = vmatprep.subr.bf16.mxu0 0
    %1027 = vmatpush1.bf16.msra.mxu0 %v968
    %1028 = vmatprep.subr.bf16.mxu0 0
    %1029 = vmatpush1.bf16.msra.mxu0 %v969
    %1030 = vmatprep.subr.bf16.mxu0 0
    %1031 = vmatpush1.bf16.msra.mxu0 %v970
    %1032 = vmatprep.subr.bf16.mxu0 0
    %1033 = vmatpush1.bf16.msra.mxu0 %v971
    %1034 = vmatprep.subr.bf16.mxu0 0
    %1035 = vmatpush1.bf16.msra.mxu0 %v972
    %1036 = vmatprep.subr.bf16.mxu0 0
    %1037 = vmatpush1.bf16.msra.mxu0 %v973
    %1038 = vmatprep.mubr.bf16.mxu0 %v801
    %1039 = vmatmul.mubr.bf16.gmra.mrb[0].mxu0 %v799
    %v1040 = vpop.f32.mrb[0].mxu0
    %v1041 = vadd.f32 %v860, %v1040
    %v1042 = vpop.f32.mrb[0].mxu0
    %v1043 = vpop.f32.mrb[0].mxu0
    %v1044 = vadd.f32 %v860, %v1043
    %v1045 = vpop.f32.mrb[0].mxu0
    %1046 = vmatprep.mubr.bf16.mxu0 %v802
    %1047 = vmatmul.mubr.bf16.gmra.mrb[0].mxu0 %v800
    %v1048 = vpop.f32.mrb[0].mxu0
    %v1049 = vadd.f32 %v860, %v1048
    %v1050 = vpop.f32.mrb[0].mxu0
    %v1051 = vpop.f32.mrb[0].mxu0
    %v1052 = vadd.f32 %v860, %v1051
    %v1053 = vpop.f32.mrb[0].mxu0
    %1054 = vdwg.mxu0
    %1055 = vmatprep.subr.bf16.mxu0 0
    %1056 = vmatpush1.bf16.msra.mxu0 %v974
    %1057 = vmatprep.subr.bf16.mxu0 0
    %1058 = vmatpush1.bf16.msra.mxu0 %v975
    %1059 = vmatprep.subr.bf16.mxu0 0
    %1060 = vmatpush1.bf16.msra.mxu0 %v976
    %1061 = vmatprep.subr.bf16.mxu0 0
    %1062 = vmatpush1.bf16.msra.mxu0 %v977
    %1063 = vmatprep.subr.bf16.mxu0 0
    %1064 = vmatpush1.bf16.msra.mxu0 %v978
    %1065 = vmatprep.subr.bf16.mxu0 0
    %1066 = vmatpush1.bf16.msra.mxu0 %v979
    %1067 = vmatprep.subr.bf16.mxu0 0
    %1068 = vmatpush1.bf16.msra.mxu0 %v980
    %1069 = vmatprep.subr.bf16.mxu0 0
    %1070 = vmatpush1.bf16.msra.mxu0 %v981
    %1071 = vmatprep.subr.bf16.mxu0 0
    %1072 = vmatpush1.bf16.msra.mxu0 0
    %1073 = vmatprep.subr.bf16.mxu0 0
    %1074 = vmatpush1.bf16.msra.mxu0 0
    %1075 = vmatprep.subr.bf16.mxu0 0
    %1076 = vmatpush1.bf16.msra.mxu0 0
    %1077 = vmatprep.subr.bf16.mxu0 0
    %1078 = vmatpush1.bf16.msra.mxu0 0
    %1079 = vmatprep.subr.bf16.mxu0 0
    %1080 = vmatpush1.bf16.msra.mxu0 0
    %1081 = vmatprep.subr.bf16.mxu0 0
    %1082 = vmatpush1.bf16.msra.mxu0 0
    %1083 = vmatprep.subr.bf16.mxu0 0
    %1084 = vmatpush1.bf16.msra.mxu0 0
    %1085 = vmatprep.subr.bf16.mxu0 0
    %1086 = vmatpush1.bf16.msra.mxu0 0
    %1087 = vmatprep.mubr.bf16.mxu0 0
    %1088 = vmatmul.mubr.bf16.gmra.mrb[0].mxu0 %v803
    %v1089 = vpop.f32.mrb[0].mxu0
    %v1090 = vadd.f32 %v1041, %v1089
    %v1091 = vpop.f32.mrb[0].mxu0
    %v1092 = vpop.f32.mrb[0].mxu0
    %v1093 = vadd.f32 %v1044, %v1092
    %v1094 = vpop.f32.mrb[0].mxu0
    %1095 = vmatprep.mubr.bf16.mxu0 0
    %1096 = vmatmul.mubr.bf16.gmra.mrb[0].mxu0 %v804
    %v1097 = vpop.f32.mrb[0].mxu0
    %v1098 = vadd.f32 %v1049, %v1097
    %v1099 = vpop.f32.mrb[0].mxu0
    %v1100 = vpop.f32.mrb[0].mxu0
    %v1101 = vadd.f32 %v1052, %v1100
    %v1102 = vpop.f32.mrb[0].mxu0
    %1103 = vdwg.mxu0
    %v1104 = vmax.f32 %v1090, 0.0
    %v1105 = vmax.f32 %v1093, 0.0
    %v1106 = vmax.f32 %v1098, 0.0
    %v1107 = vmax.f32 %v1101, 0.0
    %1108 = vst [vmem:[#allocation3 + $0x1] sm:$0xff] %v1104
    %1109 = vst [vmem:[#allocation3 + $0x9] sm:$0xff] %v1105
    %1110 = vst [vmem:[#allocation3 + $0x11] sm:$0xff] %v1106
    %1111 = vst [vmem:[#allocation3 + $0x19] sm:$0xff] %v1107
    %vm1112 = vcmp.lt.s32.totalorder %v55, 0
    %v1113 = vsub.s32 0, %v55
    %v1114 = vsel %vm1112, %v1113, %v55
    %v1115 = vshrl.u32 %v1114, 3
    %v1116 = vand.u32 %v1114, 7
    %v1117 = vsub.s32 0, %v1116
    %v1118 = vsel %vm1112, %v1117, %v1116
    %vm1119 = vcmp.lt.s32.totalorder %v56, 0
    %v1120 = vsub.s32 0, %v56
    %v1121 = vsel %vm1119, %v1120, %v56
    %v1122 = vshrl.u32 %v1121, 3
    %v1123 = vand.u32 %v1121, 7
    %v1124 = vsub.s32 0, %v1123
    %v1125 = vsel %vm1119, %v1124, %v1123
    %vm1126 = vcmp.ne.s32.totalorder %v1118, 0
    %vm1127 = vcmp.ne.s32.totalorder %v1125, 0
    %vm1128 = vcmp.lt.s32.totalorder %v1118, 0
    %vm1129 = vcmp.lt.s32.totalorder %v1125, 0
    %vm1130 = vmand %vm1128, %vm1126
    %vm1131 = vmand %vm1129, %vm1127
    %v1132 = vadd.s32 %v1118, 8
    %v1133 = vadd.s32 %v1125, 8
    %v1134 = vsel %vm1130, %v1132, %v1118
    %v1135 = vsel %vm1131, %v1133, %v1125
    %s1136 = scalar_lea.vmem [#allocation3], 1
    %v1137 = vld [vmem:[%s1136] ss:$2 sm:$0xff]
    %s1138 = scalar_lea.vmem [#allocation3], 17
    %v1139 = vld [vmem:[%s1138] ss:$2 sm:$0xff]
    %s1140 = scalar_lea.vmem [#allocation3], 2
    %v1141 = vld [vmem:[%s1140] ss:$2 sm:$0xff]
    %s1142 = scalar_lea.vmem [#allocation3], 18
    %v1143 = vld [vmem:[%s1142] ss:$2 sm:$0xff]
    %vm1144 = vcmp.eq.s32.totalorder %v1134, 0
    %vm1145 = vcmp.eq.s32.totalorder %v1135, 0
    %v1146 = vld [vmem:[#allocation3] ss:$2 sm:$0xff]
    %s1147 = scalar_lea.vmem [#allocation3], 16
    %v1148 = vld [vmem:[%s1147] ss:$2 sm:$0xff]
    %v1149 = vsel %vm1144, 0.0, %v1146
    %v1150 = vsel %vm1145, 0.0, %v1148
    %v1151 = vpack.c.bf16 %v1150, %v1149
    %v1152 = vpack.c.bf16 %v1139, %v1137
    %v1153 = vpack.c.bf16 %v1143, %v1141
    %s1154 = scalar_lea.vmem [#allocation4], 576
    %v1155 = vld [vmem:[%s1154] sm:$0xf]
    %v1156 = vld [vmem:[%s1154 + $0x4] sm:$0xf]
    %v1157 = vld [vmem:[%s1154 + $0x8] sm:$0xf]
    %v1158 = vld [vmem:[%s1154 + $0xc] sm:$0xf]
    %v1159 = vld [vmem:[%s1154 + $0x10] sm:$0xf]
    %v1160 = vld [vmem:[%s1154 + $0x14] sm:$0xf]
    %v1161 = vld [vmem:[%s1154 + $0x18] sm:$0xf]
    %v1162 = vld [vmem:[%s1154 + $0x1c] sm:$0xf]
    %v1163 = vld [vmem:[%s1154 + $0x20] sm:$0xf]
    %v1164 = vld [vmem:[%s1154 + $0x24] sm:$0xf]
    %v1165 = vld [vmem:[%s1154 + $0x28] sm:$0xf]
    %v1166 = vld [vmem:[%s1154 + $0x2c] sm:$0xf]
    %v1167 = vld [vmem:[%s1154 + $0x30] sm:$0xf]
    %v1168 = vld [vmem:[%s1154 + $0x34] sm:$0xf]
    %v1169 = vld [vmem:[%s1154 + $0x38] sm:$0xf]
    %v1170 = vld [vmem:[%s1154 + $0x3c] sm:$0xf]
    %v1171 = vld [vmem:[%s1154 + $0x40] sm:$0xf]
    %v1172 = vld [vmem:[%s1154 + $0x44] sm:$0xf]
    %v1173 = vld [vmem:[%s1154 + $0x48] sm:$0xf]
    %v1174 = vld [vmem:[%s1154 + $0x4c] sm:$0xf]
    %v1175 = vld [vmem:[%s1154 + $0x50] sm:$0xf]
    %v1176 = vld [vmem:[%s1154 + $0x54] sm:$0xf]
    %v1177 = vld [vmem:[%s1154 + $0x58] sm:$0xf]
    %v1178 = vld [vmem:[%s1154 + $0x5c] sm:$0xf]
    %v1179 = vld [vmem:[%s1154 + $0x60] sm:$0xf]
    %v1180 = vld [vmem:[%s1154 + $0x64] sm:$0xf]
    %v1181 = vld [vmem:[%s1154 + $0x68] sm:$0xf]
    %v1182 = vld [vmem:[%s1154 + $0x6c] sm:$0xf]
    %v1183 = vld [vmem:[%s1154 + $0x70] sm:$0xf]
    %v1184 = vld [vmem:[%s1154 + $0x74] sm:$0xf]
    %v1185 = vld [vmem:[%s1154 + $0x78] sm:$0xf]
    %v1186 = vld [vmem:[%s1154 + $0x7c] sm:$0xf]
    %v1187 = vld [vmem:[%s1154 + $0x80] sm:$0xf]
    %v1188 = vld [vmem:[%s1154 + $0x84] sm:$0xf]
    %v1189 = vld [vmem:[%s1154 + $0x88] sm:$0xf]
    %v1190 = vld [vmem:[%s1154 + $0x8c] sm:$0xf]
    %v1191 = vld [vmem:[%s1154 + $0x90] sm:$0xf]
    %v1192 = vld [vmem:[%s1154 + $0x94] sm:$0xf]
    %v1193 = vld [vmem:[%s1154 + $0x98] sm:$0xf]
    %v1194 = vld [vmem:[%s1154 + $0x9c] sm:$0xf]
    %v1195 = vld [vmem:[%s1154 + $0xa0] sm:$0xf]
    %v1196 = vld [vmem:[%s1154 + $0xa4] sm:$0xf]
    %v1197 = vld [vmem:[%s1154 + $0xa8] sm:$0xf]
    %v1198 = vld [vmem:[%s1154 + $0xac] sm:$0xf]
    %v1199 = vld [vmem:[%s1154 + $0xb0] sm:$0xf]
    %v1200 = vld [vmem:[%s1154 + $0xb4] sm:$0xf]
    %v1201 = vld [vmem:[%s1154 + $0xb8] sm:$0xf]
    %v1202 = vld [vmem:[%s1154 + $0xbc] sm:$0xf]
    %s1203 = scalar_lea.vmem %s2, 3
    %v1204 = vld [vmem:[%s1203] sm:$0x1]
    %v1206 = vlaneseq
    %v1207 = vshrl.u32 %v1206, 7
    %v1208 = vsub.s32 0, %v1207
    %v1209 = vrot.slane %v1204, %v1208
    %v1259 = vunpack.c.l.b16 %v1155
    %v1260 = vunpack.c.l.b16 %v1156
    %v1261 = vunpack.c.l.b16 %v1157
    %v1262 = vunpack.c.l.b16 %v1158
    %v1263 = vunpack.c.l.b16 %v1159
    %v1264 = vunpack.c.l.b16 %v1160
    %v1265 = vunpack.c.l.b16 %v1161
    %v1266 = vunpack.c.l.b16 %v1162
    %v1267 = vunpack.c.l.b16 %v1163
    %v1268 = vunpack.c.l.b16 %v1164
    %v1269 = vunpack.c.l.b16 %v1165
    %v1270 = vunpack.c.l.b16 %v1166
    %v1271 = vunpack.c.l.b16 %v1167
    %v1272 = vunpack.c.l.b16 %v1168
    %v1273 = vunpack.c.l.b16 %v1169
    %v1274 = vunpack.c.l.b16 %v1170
    %v1275 = vunpack.c.l.b16 %v1171
    %v1276 = vunpack.c.l.b16 %v1172
    %v1277 = vunpack.c.l.b16 %v1173
    %v1278 = vunpack.c.l.b16 %v1174
    %v1279 = vunpack.c.l.b16 %v1175
    %v1280 = vunpack.c.l.b16 %v1176
    %v1281 = vunpack.c.l.b16 %v1177
    %v1282 = vunpack.c.l.b16 %v1178
    %v1283 = vunpack.c.l.b16 %v1179
    %v1284 = vunpack.c.l.b16 %v1180
    %v1285 = vunpack.c.l.b16 %v1181
    %v1286 = vunpack.c.l.b16 %v1182
    %v1287 = vunpack.c.l.b16 %v1183
    %v1288 = vunpack.c.l.b16 %v1184
    %v1289 = vunpack.c.l.b16 %v1185
    %v1290 = vunpack.c.l.b16 %v1186
    %v1291 = vunpack.c.l.b16 %v1187
    %v1292 = vunpack.c.l.b16 %v1188
    %v1293 = vunpack.c.l.b16 %v1189
    %v1294 = vunpack.c.l.b16 %v1190
    %v1295 = vunpack.c.l.b16 %v1191
    %v1296 = vunpack.c.l.b16 %v1192
    %v1297 = vunpack.c.l.b16 %v1193
    %v1298 = vunpack.c.l.b16 %v1194
    %v1299 = vunpack.c.l.b16 %v1195
    %v1300 = vunpack.c.l.b16 %v1196
    %v1301 = vunpack.c.l.b16 %v1197
    %v1302 = vunpack.c.l.b16 %v1198
    %v1303 = vunpack.c.l.b16 %v1199
    %v1304 = vunpack.c.l.b16 %v1200
    %v1305 = vunpack.c.l.b16 %v1201
    %v1306 = vunpack.c.l.b16 %v1202
    %v1307 = vpack.c.b16 %v1260, %v1259
    %v1308 = vpack.c.b16 %v1262, %v1261
    %v1309 = vpack.c.b16 %v1264, %v1263
    %v1310 = vpack.c.b16 %v1266, %v1265
    %v1311 = vpack.c.b16 %v1268, %v1267
    %v1312 = vpack.c.b16 %v1270, %v1269
    %v1313 = vpack.c.b16 %v1272, %v1271
    %v1314 = vpack.c.b16 %v1274, %v1273
    %v1315 = vpack.c.b16 %v1276, %v1275
    %v1316 = vpack.c.b16 %v1278, %v1277
    %v1317 = vpack.c.b16 %v1280, %v1279
    %v1318 = vpack.c.b16 %v1282, %v1281
    %v1319 = vpack.c.b16 %v1284, %v1283
    %v1320 = vpack.c.b16 %v1286, %v1285
    %v1321 = vpack.c.b16 %v1288, %v1287
    %v1322 = vpack.c.b16 %v1290, %v1289
    %v1323 = vpack.c.b16 %v1292, %v1291
    %v1324 = vpack.c.b16 %v1294, %v1293
    %v1325 = vpack.c.b16 %v1296, %v1295
    %v1326 = vpack.c.b16 %v1298, %v1297
    %v1327 = vpack.c.b16 %v1300, %v1299
    %v1328 = vpack.c.b16 %v1302, %v1301
    %v1329 = vpack.c.b16 %v1304, %v1303
    %v1330 = vpack.c.b16 %v1306, %v1305
    %1355 = vmatprep.subr.bf16.mxu0 0
    %1356 = vmatpush1.bf16.msra.mxu0 %v1307
    %1357 = vmatprep.subr.bf16.mxu0 0
    %1358 = vmatpush1.bf16.msra.mxu0 %v1308
    %1359 = vmatprep.subr.bf16.mxu0 0
    %1360 = vmatpush1.bf16.msra.mxu0 %v1309
    %1361 = vmatprep.subr.bf16.mxu0 0
    %1362 = vmatpush1.bf16.msra.mxu0 %v1310
    %1363 = vmatprep.subr.bf16.mxu0 0
    %1364 = vmatpush1.bf16.msra.mxu0 %v1311
    %1365 = vmatprep.subr.bf16.mxu0 0
    %1366 = vmatpush1.bf16.msra.mxu0 %v1312
    %1367 = vmatprep.subr.bf16.mxu0 0
    %1368 = vmatpush1.bf16.msra.mxu0 %v1313
    %1369 = vmatprep.subr.bf16.mxu0 0
    %1370 = vmatpush1.bf16.msra.mxu0 %v1314
    %1371 = vmatprep.subr.bf16.mxu0 0
    %1372 = vmatpush1.bf16.msra.mxu0 %v1315
    %1373 = vmatprep.subr.bf16.mxu0 0
    %1374 = vmatpush1.bf16.msra.mxu0 %v1316
    %1375 = vmatprep.subr.bf16.mxu0 0
    %1376 = vmatpush1.bf16.msra.mxu0 %v1317
    %1377 = vmatprep.subr.bf16.mxu0 0
    %1378 = vmatpush1.bf16.msra.mxu0 %v1318
    %1379 = vmatprep.subr.bf16.mxu0 0
    %1380 = vmatpush1.bf16.msra.mxu0 %v1319
    %1381 = vmatprep.subr.bf16.mxu0 0
    %1382 = vmatpush1.bf16.msra.mxu0 %v1320
    %1383 = vmatprep.subr.bf16.mxu0 0
    %1384 = vmatpush1.bf16.msra.mxu0 %v1321
    %1385 = vmatprep.subr.bf16.mxu0 0
    %1386 = vmatpush1.bf16.msra.mxu0 %v1322
    %1387 = vmatprep.mubr.bf16.mxu0 %v1152
    %1388 = vmatmul.mubr.bf16.gmra.mrb[0].mxu0 %v1151
    %v1389 = vpop.f32.mrb[0].mxu0
    %v1390 = vadd.f32 %v1209, %v1389
    %v1391 = vpop.f32.mrb[0].mxu0
    %v1392 = vpop.f32.mrb[0].mxu0
    %v1393 = vadd.f32 %v1209, %v1392
    %v1394 = vpop.f32.mrb[0].mxu0
    %1395 = vdwg.mxu0
    %1396 = vmatprep.subr.bf16.mxu0 0
    %1397 = vmatpush1.bf16.msra.mxu0 %v1323
    %1398 = vmatprep.subr.bf16.mxu0 0
    %1399 = vmatpush1.bf16.msra.mxu0 %v1324
    %1400 = vmatprep.subr.bf16.mxu0 0
    %1401 = vmatpush1.bf16.msra.mxu0 %v1325
    %1402 = vmatprep.subr.bf16.mxu0 0
    %1403 = vmatpush1.bf16.msra.mxu0 %v1326
    %1404 = vmatprep.subr.bf16.mxu0 0
    %1405 = vmatpush1.bf16.msra.mxu0 %v1327
    %1406 = vmatprep.subr.bf16.mxu0 0
    %1407 = vmatpush1.bf16.msra.mxu0 %v1328
    %1408 = vmatprep.subr.bf16.mxu0 0
    %1409 = vmatpush1.bf16.msra.mxu0 %v1329
    %1410 = vmatprep.subr.bf16.mxu0 0
    %1411 = vmatpush1.bf16.msra.mxu0 %v1330
    %1412 = vmatprep.subr.bf16.mxu0 0
    %1413 = vmatpush1.bf16.msra.mxu0 0
    %1414 = vmatprep.subr.bf16.mxu0 0
    %1415 = vmatpush1.bf16.msra.mxu0 0
    %1416 = vmatprep.subr.bf16.mxu0 0
    %1417 = vmatpush1.bf16.msra.mxu0 0
    %1418 = vmatprep.subr.bf16.mxu0 0
    %1419 = vmatpush1.bf16.msra.mxu0 0
    %1420 = vmatprep.subr.bf16.mxu0 0
    %1421 = vmatpush1.bf16.msra.mxu0 0
    %1422 = vmatprep.subr.bf16.mxu0 0
    %1423 = vmatpush1.bf16.msra.mxu0 0
    %1424 = vmatprep.subr.bf16.mxu0 0
    %1425 = vmatpush1.bf16.msra.mxu0 0
    %1426 = vmatprep.subr.bf16.mxu0 0
    %1427 = vmatpush1.bf16.msra.mxu0 0
    %1428 = vmatprep.mubr.bf16.mxu0 0
    %1429 = vmatmul.mubr.bf16.gmra.mrb[0].mxu0 %v1153
    %v1430 = vpop.f32.mrb[0].mxu0
    %v1431 = vadd.f32 %v1390, %v1430
    %v1432 = vpop.f32.mrb[0].mxu0
    %v1433 = vpop.f32.mrb[0].mxu0
    %v1434 = vadd.f32 %v1393, %v1433
    %v1435 = vpop.f32.mrb[0].mxu0
    %1436 = vdwg.mxu0
    %v1437 = vmax.f32 %v1431, 0.0
    %v1438 = vmax.f32 %v1434, 0.0
    %1439 = vst [vmem:[#allocation2 + $0x1] sm:$0xff] %v1437
    %1440 = vst [vmem:[#allocation2 + $0x9] sm:$0xff] %v1438
    %v1441 = vld [vmem:[#allocation2 + $0x1] sm:$0xff]
    %v1442 = vld [vmem:[#allocation2 + $0x9] sm:$0xff]
    %v1443 = vld [vmem:[#allocation2] sm:$0xff]
    %v1444 = vld [vmem:[#allocation2 + $0x8] sm:$0xff]
    %v1445 = vsel %vm1144, 0.0, %v1443
    %v1446 = vsel %vm1145, 0.0, %v1444
    %vm1447 = vcmp.eq.s32.totalorder %v1134, 7
    %vm1448 = vcmp.eq.s32.totalorder %v1135, 7
    %v1449 = vld [vmem:[#allocation2 + $0x2] sm:$0xff]
    %v1450 = vld [vmem:[#allocation2 + $0xa] sm:$0xff]
    %v1451 = vsel %vm1447, 0.0, %v1449
    %v1452 = vsel %vm1448, 0.0, %v1450
    %v1453 = vpack.c.bf16 %v1446, %v1445
    %v1454 = vpack.c.bf16 %v1442, %v1441
    %v1455 = vpack.c.bf16 %v1452, %v1451
    %s1456 = scalar_lea.vmem [#allocation4], 768
    %v1457 = vld [vmem:[%s1456] sm:$0xf]
    %v1458 = vld [vmem:[%s1456 + $0x4] sm:$0xf]
    %v1459 = vld [vmem:[%s1456 + $0x8] sm:$0xf]
    %v1460 = vld [vmem:[%s1456 + $0xc] sm:$0xf]
    %v1461 = vld [vmem:[%s1456 + $0x10] sm:$0xf]
    %v1462 = vld [vmem:[%s1456 + $0x14] sm:$0xf]
    %v1463 = vld [vmem:[%s1456 + $0x18] sm:$0xf]
    %v1464 = vld [vmem:[%s1456 + $0x1c] sm:$0xf]
    %v1465 = vld [vmem:[%s1456 + $0x20] sm:$0xf]
    %v1466 = vld [vmem:[%s1456 + $0x24] sm:$0xf]
    %v1467 = vld [vmem:[%s1456 + $0x28] sm:$0xf]
    %v1468 = vld [vmem:[%s1456 + $0x2c] sm:$0xf]
    %v1469 = vld [vmem:[%s1456 + $0x30] sm:$0xf]
    %v1470 = vld [vmem:[%s1456 + $0x34] sm:$0xf]
    %v1471 = vld [vmem:[%s1456 + $0x38] sm:$0xf]
    %v1472 = vld [vmem:[%s1456 + $0x3c] sm:$0xf]
    %v1473 = vld [vmem:[%s1456 + $0x40] sm:$0xf]
    %v1474 = vld [vmem:[%s1456 + $0x44] sm:$0xf]
    %v1475 = vld [vmem:[%s1456 + $0x48] sm:$0xf]
    %v1476 = vld [vmem:[%s1456 + $0x4c] sm:$0xf]
    %v1477 = vld [vmem:[%s1456 + $0x50] sm:$0xf]
    %v1478 = vld [vmem:[%s1456 + $0x54] sm:$0xf]
    %v1479 = vld [vmem:[%s1456 + $0x58] sm:$0xf]
    %v1480 = vld [vmem:[%s1456 + $0x5c] sm:$0xf]
    %v1481 = vld [vmem:[%s1456 + $0x60] sm:$0xf]
    %v1482 = vld [vmem:[%s1456 + $0x64] sm:$0xf]
    %v1483 = vld [vmem:[%s1456 + $0x68] sm:$0xf]
    %v1484 = vld [vmem:[%s1456 + $0x6c] sm:$0xf]
    %v1485 = vld [vmem:[%s1456 + $0x70] sm:$0xf]
    %v1486 = vld [vmem:[%s1456 + $0x74] sm:$0xf]
    %v1487 = vld [vmem:[%s1456 + $0x78] sm:$0xf]
    %v1488 = vld [vmem:[%s1456 + $0x7c] sm:$0xf]
    %v1489 = vld [vmem:[%s1456 + $0x80] sm:$0xf]
    %v1490 = vld [vmem:[%s1456 + $0x84] sm:$0xf]
    %v1491 = vld [vmem:[%s1456 + $0x88] sm:$0xf]
    %v1492 = vld [vmem:[%s1456 + $0x8c] sm:$0xf]
    %v1493 = vld [vmem:[%s1456 + $0x90] sm:$0xf]
    %v1494 = vld [vmem:[%s1456 + $0x94] sm:$0xf]
    %v1495 = vld [vmem:[%s1456 + $0x98] sm:$0xf]
    %v1496 = vld [vmem:[%s1456 + $0x9c] sm:$0xf]
    %v1497 = vld [vmem:[%s1456 + $0xa0] sm:$0xf]
    %v1498 = vld [vmem:[%s1456 + $0xa4] sm:$0xf]
    %v1499 = vld [vmem:[%s1456 + $0xa8] sm:$0xf]
    %v1500 = vld [vmem:[%s1456 + $0xac] sm:$0xf]
    %v1501 = vld [vmem:[%s1456 + $0xb0] sm:$0xf]
    %v1502 = vld [vmem:[%s1456 + $0xb4] sm:$0xf]
    %v1503 = vld [vmem:[%s1456 + $0xb8] sm:$0xf]
    %v1504 = vld [vmem:[%s1456 + $0xbc] sm:$0xf]
    %s1505 = scalar_lea.vmem %s2, 4
    %v1506 = vld [vmem:[%s1505] sm:$0x1]
    %v1508 = vlaneseq
    %v1509 = vshrl.u32 %v1508, 7
    %v1510 = vsub.s32 0, %v1509
    %v1511 = vrot.slane %v1506, %v1510
    %v1561 = vunpack.c.l.b16 %v1457
    %v1562 = vunpack.c.l.b16 %v1458
    %v1563 = vunpack.c.l.b16 %v1459
    %v1564 = vunpack.c.l.b16 %v1460
    %v1565 = vunpack.c.l.b16 %v1461
    %v1566 = vunpack.c.l.b16 %v1462
    %v1567 = vunpack.c.l.b16 %v1463
    %v1568 = vunpack.c.l.b16 %v1464
    %v1569 = vunpack.c.l.b16 %v1465
    %v1570 = vunpack.c.l.b16 %v1466
    %v1571 = vunpack.c.l.b16 %v1467
    %v1572 = vunpack.c.l.b16 %v1468
    %v1573 = vunpack.c.l.b16 %v1469
    %v1574 = vunpack.c.l.b16 %v1470
    %v1575 = vunpack.c.l.b16 %v1471
    %v1576 = vunpack.c.l.b16 %v1472
    %v1577 = vunpack.c.l.b16 %v1473
    %v1578 = vunpack.c.l.b16 %v1474
    %v1579 = vunpack.c.l.b16 %v1475
    %v1580 = vunpack.c.l.b16 %v1476
    %v1581 = vunpack.c.l.b16 %v1477
    %v1582 = vunpack.c.l.b16 %v1478
    %v1583 = vunpack.c.l.b16 %v1479
    %v1584 = vunpack.c.l.b16 %v1480
    %v1585 = vunpack.c.l.b16 %v1481
    %v1586 = vunpack.c.l.b16 %v1482
    %v1587 = vunpack.c.l.b16 %v1483
    %v1588 = vunpack.c.l.b16 %v1484
    %v1589 = vunpack.c.l.b16 %v1485
    %v1590 = vunpack.c.l.b16 %v1486
    %v1591 = vunpack.c.l.b16 %v1487
    %v1592 = vunpack.c.l.b16 %v1488
    %v1593 = vunpack.c.l.b16 %v1489
    %v1594 = vunpack.c.l.b16 %v1490
    %v1595 = vunpack.c.l.b16 %v1491
    %v1596 = vunpack.c.l.b16 %v1492
    %v1597 = vunpack.c.l.b16 %v1493
    %v1598 = vunpack.c.l.b16 %v1494
    %v1599 = vunpack.c.l.b16 %v1495
    %v1600 = vunpack.c.l.b16 %v1496
    %v1601 = vunpack.c.l.b16 %v1497
    %v1602 = vunpack.c.l.b16 %v1498
    %v1603 = vunpack.c.l.b16 %v1499
    %v1604 = vunpack.c.l.b16 %v1500
    %v1605 = vunpack.c.l.b16 %v1501
    %v1606 = vunpack.c.l.b16 %v1502
    %v1607 = vunpack.c.l.b16 %v1503
    %v1608 = vunpack.c.l.b16 %v1504
    %v1609 = vpack.c.b16 %v1562, %v1561
    %v1610 = vpack.c.b16 %v1564, %v1563
    %v1611 = vpack.c.b16 %v1566, %v1565
    %v1612 = vpack.c.b16 %v1568, %v1567
    %v1613 = vpack.c.b16 %v1570, %v1569
    %v1614 = vpack.c.b16 %v1572, %v1571
    %v1615 = vpack.c.b16 %v1574, %v1573
    %v1616 = vpack.c.b16 %v1576, %v1575
    %v1617 = vpack.c.b16 %v1578, %v1577
    %v1618 = vpack.c.b16 %v1580, %v1579
    %v1619 = vpack.c.b16 %v1582, %v1581
    %v1620 = vpack.c.b16 %v1584, %v1583
    %v1621 = vpack.c.b16 %v1586, %v1585
    %v1622 = vpack.c.b16 %v1588, %v1587
    %v1623 = vpack.c.b16 %v1590, %v1589
    %v1624 = vpack.c.b16 %v1592, %v1591
    %v1625 = vpack.c.b16 %v1594, %v1593
    %v1626 = vpack.c.b16 %v1596, %v1595
    %v1627 = vpack.c.b16 %v1598, %v1597
    %v1628 = vpack.c.b16 %v1600, %v1599
    %v1629 = vpack.c.b16 %v1602, %v1601
    %v1630 = vpack.c.b16 %v1604, %v1603
    %v1631 = vpack.c.b16 %v1606, %v1605
    %v1632 = vpack.c.b16 %v1608, %v1607
    %1657 = vmatprep.subr.bf16.mxu0 0
    %1658 = vmatpush1.bf16.msra.mxu0 %v1609
    %1659 = vmatprep.subr.bf16.mxu0 0
    %1660 = vmatpush1.bf16.msra.mxu0 %v1610
    %1661 = vmatprep.subr.bf16.mxu0 0
    %1662 = vmatpush1.bf16.msra.mxu0 %v1611
    %1663 = vmatprep.subr.bf16.mxu0 0
    %1664 = vmatpush1.bf16.msra.mxu0 %v1612
    %1665 = vmatprep.subr.bf16.mxu0 0
    %1666 = vmatpush1.bf16.msra.mxu0 %v1613
    %1667 = vmatprep.subr.bf16.mxu0 0
    %1668 = vmatpush1.bf16.msra.mxu0 %v1614
    %1669 = vmatprep.subr.bf16.mxu0 0
    %1670 = vmatpush1.bf16.msra.mxu0 %v1615
    %1671 = vmatprep.subr.bf16.mxu0 0
    %1672 = vmatpush1.bf16.msra.mxu0 %v1616
    %1673 = vmatprep.subr.bf16.mxu0 0
    %1674 = vmatpush1.bf16.msra.mxu0 %v1617
    %1675 = vmatprep.subr.bf16.mxu0 0
    %1676 = vmatpush1.bf16.msra.mxu0 %v1618
    %1677 = vmatprep.subr.bf16.mxu0 0
    %1678 = vmatpush1.bf16.msra.mxu0 %v1619
    %1679 = vmatprep.subr.bf16.mxu0 0
    %1680 = vmatpush1.bf16.msra.mxu0 %v1620
    %1681 = vmatprep.subr.bf16.mxu0 0
    %1682 = vmatpush1.bf16.msra.mxu0 %v1621
    %1683 = vmatprep.subr.bf16.mxu0 0
    %1684 = vmatpush1.bf16.msra.mxu0 %v1622
    %1685 = vmatprep.subr.bf16.mxu0 0
    %1686 = vmatpush1.bf16.msra.mxu0 %v1623
    %1687 = vmatprep.subr.bf16.mxu0 0
    %1688 = vmatpush1.bf16.msra.mxu0 %v1624
    %1689 = vmatprep.mubr.bf16.mxu0 %v1454
    %1690 = vmatmul.mubr.bf16.gmra.mrb[0].mxu0 %v1453
    %v1691 = vpop.f32.mrb[0].mxu0
    %v1692 = vadd.f32 %v1511, %v1691
    %v1693 = vpop.f32.mrb[0].mxu0
    %v1694 = vpop.f32.mrb[0].mxu0
    %v1695 = vadd.f32 %v1511, %v1694
    %v1696 = vpop.f32.mrb[0].mxu0
    %1697 = vdwg.mxu0
    %1698 = vmatprep.subr.bf16.mxu0 0
    %1699 = vmatpush1.bf16.msra.mxu0 %v1625
    %1700 = vmatprep.subr.bf16.mxu0 0
    %1701 = vmatpush1.bf16.msra.mxu0 %v1626
    %1702 = vmatprep.subr.bf16.mxu0 0
    %1703 = vmatpush1.bf16.msra.mxu0 %v1627
    %1704 = vmatprep.subr.bf16.mxu0 0
    %1705 = vmatpush1.bf16.msra.mxu0 %v1628
    %1706 = vmatprep.subr.bf16.mxu0 0
    %1707 = vmatpush1.bf16.msra.mxu0 %v1629
    %1708 = vmatprep.subr.bf16.mxu0 0
    %1709 = vmatpush1.bf16.msra.mxu0 %v1630
    %1710 = vmatprep.subr.bf16.mxu0 0
    %1711 = vmatpush1.bf16.msra.mxu0 %v1631
    %1712 = vmatprep.subr.bf16.mxu0 0
    %1713 = vmatpush1.bf16.msra.mxu0 %v1632
    %1714 = vmatprep.subr.bf16.mxu0 0
    %1715 = vmatpush1.bf16.msra.mxu0 0
    %1716 = vmatprep.subr.bf16.mxu0 0
    %1717 = vmatpush1.bf16.msra.mxu0 0
    %1718 = vmatprep.subr.bf16.mxu0 0
    %1719 = vmatpush1.bf16.msra.mxu0 0
    %1720 = vmatprep.subr.bf16.mxu0 0
    %1721 = vmatpush1.bf16.msra.mxu0 0
    %1722 = vmatprep.subr.bf16.mxu0 0
    %1723 = vmatpush1.bf16.msra.mxu0 0
    %1724 = vmatprep.subr.bf16.mxu0 0
    %1725 = vmatpush1.bf16.msra.mxu0 0
    %1726 = vmatprep.subr.bf16.mxu0 0
    %1727 = vmatpush1.bf16.msra.mxu0 0
    %1728 = vmatprep.subr.bf16.mxu0 0
    %1729 = vmatpush1.bf16.msra.mxu0 0
    %1730 = vmatprep.mubr.bf16.mxu0 0
    %1731 = vmatmul.mubr.bf16.gmra.mrb[0].mxu0 %v1455
    %v1732 = vpop.f32.mrb[0].mxu0
    %v1733 = vadd.f32 %v1692, %v1732
    %v1734 = vpop.f32.mrb[0].mxu0
    %v1735 = vpop.f32.mrb[0].mxu0
    %v1736 = vadd.f32 %v1695, %v1735
    %v1737 = vpop.f32.mrb[0].mxu0
    %1738 = vdwg.mxu0
    %v1739 = vmax.f32 %v1733, 0.0
    %v1740 = vmax.f32 %v1736, 0.0
    %1741 = vst [vmem:[#allocation3 + $0x1] sm:$0xff] %v1739
    %1742 = vst [vmem:[#allocation3 + $0x9] sm:$0xff] %v1740
    %vm1743 = vcmp.lt.s32.totalorder %v55, 0
    %v1744 = vsub.s32 0, %v55
    %v1745 = vsel %vm1743, %v1744, %v55
    %v1746 = vshrl.u32 %v1745, 2
    %v1747 = vand.u32 %v1745, 3
    %v1748 = vsub.s32 0, %v1747
    %v1749 = vsel %vm1743, %v1748, %v1747
    %vm1750 = vcmp.ne.s32.totalorder %v1749, 0
    %vm1751 = vcmp.lt.s32.totalorder %v1749, 0
    %vm1752 = vmand %vm1751, %vm1750
    %v1753 = vadd.s32 %v1749, 4
    %v1754 = vsel %vm1752, %v1753, %v1749
    %v1755 = vld [vmem:[%s1136] ss:$2 sm:$0xff]
    %s1756 = scalar_lea.vmem [#allocation3], 2
    %v1757 = vld [vmem:[%s1756] ss:$2 sm:$0xff]
    %vm1758 = vcmp.eq.s32.totalorder %v1754, 0
    %v1759 = vld [vmem:[#allocation3] ss:$2 sm:$0xff]
    %v1760 = vsel %vm1758, 0.0, %v1759
    %v1761 = vpack.c.bf16 %v1760, %v1760
    %v1762 = vpack.c.bf16 %v1755, %v1755
    %v1763 = vpack.c.bf16 %v1757, %v1757
    %s1764 = scalar_lea.vmem [#allocation4], 960
    %v1765 = vld [vmem:[%s1764] sm:$0xf]
    %v1766 = vld [vmem:[%s1764 + $0x4] sm:$0xf]
    %v1767 = vld [vmem:[%s1764 + $0x8] sm:$0xf]
    %v1768 = vld [vmem:[%s1764 + $0xc] sm:$0xf]
    %v1769 = vld [vmem:[%s1764 + $0x10] sm:$0xf]
    %v1770 = vld [vmem:[%s1764 + $0x14] sm:$0xf]
    %v1771 = vld [vmem:[%s1764 + $0x18] sm:$0xf]
    %v1772 = vld [vmem:[%s1764 + $0x1c] sm:$0xf]
    %v1773 = vld [vmem:[%s1764 + $0x20] sm:$0xf]
    %v1774 = vld [vmem:[%s1764 + $0x24] sm:$0xf]
    %v1775 = vld [vmem:[%s1764 + $0x28] sm:$0xf]
    %v1776 = vld [vmem:[%s1764 + $0x2c] sm:$0xf]
    %v1777 = vld [vmem:[%s1764 + $0x30] sm:$0xf]
    %v1778 = vld [vmem:[%s1764 + $0x34] sm:$0xf]
    %v1779 = vld [vmem:[%s1764 + $0x38] sm:$0xf]
    %v1780 = vld [vmem:[%s1764 + $0x3c] sm:$0xf]
    %v1781 = vld [vmem:[%s1764 + $0x40] sm:$0xf]
    %v1782 = vld [vmem:[%s1764 + $0x44] sm:$0xf]
    %v1783 = vld [vmem:[%s1764 + $0x48] sm:$0xf]
    %v1784 = vld [vmem:[%s1764 + $0x4c] sm:$0xf]
    %v1785 = vld [vmem:[%s1764 + $0x50] sm:$0xf]
    %v1786 = vld [vmem:[%s1764 + $0x54] sm:$0xf]
    %v1787 = vld [vmem:[%s1764 + $0x58] sm:$0xf]
    %v1788 = vld [vmem:[%s1764 + $0x5c] sm:$0xf]
    %v1789 = vld [vmem:[%s1764 + $0x60] sm:$0xf]
    %v1790 = vld [vmem:[%s1764 + $0x64] sm:$0xf]
    %v1791 = vld [vmem:[%s1764 + $0x68] sm:$0xf]
    %v1792 = vld [vmem:[%s1764 + $0x6c] sm:$0xf]
    %v1793 = vld [vmem:[%s1764 + $0x70] sm:$0xf]
    %v1794 = vld [vmem:[%s1764 + $0x74] sm:$0xf]
    %v1795 = vld [vmem:[%s1764 + $0x78] sm:$0xf]
    %v1796 = vld [vmem:[%s1764 + $0x7c] sm:$0xf]
    %v1797 = vld [vmem:[%s1764 + $0x80] sm:$0xf]
    %v1798 = vld [vmem:[%s1764 + $0x84] sm:$0xf]
    %v1799 = vld [vmem:[%s1764 + $0x88] sm:$0xf]
    %v1800 = vld [vmem:[%s1764 + $0x8c] sm:$0xf]
    %v1801 = vld [vmem:[%s1764 + $0x90] sm:$0xf]
    %v1802 = vld [vmem:[%s1764 + $0x94] sm:$0xf]
    %v1803 = vld [vmem:[%s1764 + $0x98] sm:$0xf]
    %v1804 = vld [vmem:[%s1764 + $0x9c] sm:$0xf]
    %v1805 = vld [vmem:[%s1764 + $0xa0] sm:$0xf]
    %v1806 = vld [vmem:[%s1764 + $0xa4] sm:$0xf]
    %v1807 = vld [vmem:[%s1764 + $0xa8] sm:$0xf]
    %v1808 = vld [vmem:[%s1764 + $0xac] sm:$0xf]
    %v1809 = vld [vmem:[%s1764 + $0xb0] sm:$0xf]
    %v1810 = vld [vmem:[%s1764 + $0xb4] sm:$0xf]
    %v1811 = vld [vmem:[%s1764 + $0xb8] sm:$0xf]
    %v1812 = vld [vmem:[%s1764 + $0xbc] sm:$0xf]
    %s1813 = scalar_lea.vmem %s2, 5
    %v1814 = vld [vmem:[%s1813] sm:$0x1]
    %v1816 = vlaneseq
    %v1817 = vshrl.u32 %v1816, 7
    %v1818 = vsub.s32 0, %v1817
    %v1819 = vrot.slane %v1814, %v1818
    %v1869 = vunpack.c.l.b16 %v1765
    %v1870 = vunpack.c.l.b16 %v1766
    %v1871 = vunpack.c.l.b16 %v1767
    %v1872 = vunpack.c.l.b16 %v1768
    %v1873 = vunpack.c.l.b16 %v1769
    %v1874 = vunpack.c.l.b16 %v1770
    %v1875 = vunpack.c.l.b16 %v1771
    %v1876 = vunpack.c.l.b16 %v1772
    %v1877 = vunpack.c.l.b16 %v1773
    %v1878 = vunpack.c.l.b16 %v1774
    %v1879 = vunpack.c.l.b16 %v1775
    %v1880 = vunpack.c.l.b16 %v1776
    %v1881 = vunpack.c.l.b16 %v1777
    %v1882 = vunpack.c.l.b16 %v1778
    %v1883 = vunpack.c.l.b16 %v1779
    %v1884 = vunpack.c.l.b16 %v1780
    %v1885 = vunpack.c.l.b16 %v1781
    %v1886 = vunpack.c.l.b16 %v1782
    %v1887 = vunpack.c.l.b16 %v1783
    %v1888 = vunpack.c.l.b16 %v1784
    %v1889 = vunpack.c.l.b16 %v1785
    %v1890 = vunpack.c.l.b16 %v1786
    %v1891 = vunpack.c.l.b16 %v1787
    %v1892 = vunpack.c.l.b16 %v1788
    %v1893 = vunpack.c.l.b16 %v1789
    %v1894 = vunpack.c.l.b16 %v1790
    %v1895 = vunpack.c.l.b16 %v1791
    %v1896 = vunpack.c.l.b16 %v1792
    %v1897 = vunpack.c.l.b16 %v1793
    %v1898 = vunpack.c.l.b16 %v1794
    %v1899 = vunpack.c.l.b16 %v1795
    %v1900 = vunpack.c.l.b16 %v1796
    %v1901 = vunpack.c.l.b16 %v1797
    %v1902 = vunpack.c.l.b16 %v1798
    %v1903 = vunpack.c.l.b16 %v1799
    %v1904 = vunpack.c.l.b16 %v1800
    %v1905 = vunpack.c.l.b16 %v1801
    %v1906 = vunpack.c.l.b16 %v1802
    %v1907 = vunpack.c.l.b16 %v1803
    %v1908 = vunpack.c.l.b16 %v1804
    %v1909 = vunpack.c.l.b16 %v1805
    %v1910 = vunpack.c.l.b16 %v1806
    %v1911 = vunpack.c.l.b16 %v1807
    %v1912 = vunpack.c.l.b16 %v1808
    %v1913 = vunpack.c.l.b16 %v1809
    %v1914 = vunpack.c.l.b16 %v1810
    %v1915 = vunpack.c.l.b16 %v1811
    %v1916 = vunpack.c.l.b16 %v1812
    %v1917 = vpack.c.b16 %v1870, %v1869
    %v1918 = vpack.c.b16 %v1872, %v1871
    %v1919 = vpack.c.b16 %v1874, %v1873
    %v1920 = vpack.c.b16 %v1876, %v1875
    %v1921 = vpack.c.b16 %v1878, %v1877
    %v1922 = vpack.c.b16 %v1880, %v1879
    %v1923 = vpack.c.b16 %v1882, %v1881
    %v1924 = vpack.c.b16 %v1884, %v1883
    %v1925 = vpack.c.b16 %v1886, %v1885
    %v1926 = vpack.c.b16 %v1888, %v1887
    %v1927 = vpack.c.b16 %v1890, %v1889
    %v1928 = vpack.c.b16 %v1892, %v1891
    %v1929 = vpack.c.b16 %v1894, %v1893
    %v1930 = vpack.c.b16 %v1896, %v1895
    %v1931 = vpack.c.b16 %v1898, %v1897
    %v1932 = vpack.c.b16 %v1900, %v1899
    %v1933 = vpack.c.b16 %v1902, %v1901
    %v1934 = vpack.c.b16 %v1904, %v1903
    %v1935 = vpack.c.b16 %v1906, %v1905
    %v1936 = vpack.c.b16 %v1908, %v1907
    %v1937 = vpack.c.b16 %v1910, %v1909
    %v1938 = vpack.c.b16 %v1912, %v1911
    %v1939 = vpack.c.b16 %v1914, %v1913
    %v1940 = vpack.c.b16 %v1916, %v1915
    %1965 = vmatprep.subr.bf16.mxu0 0
    %1966 = vmatpush1.bf16.msra.mxu0 %v1917
    %1967 = vmatprep.subr.bf16.mxu0 0
    %1968 = vmatpush1.bf16.msra.mxu0 %v1918
    %1969 = vmatprep.subr.bf16.mxu0 0
    %1970 = vmatpush1.bf16.msra.mxu0 %v1919
    %1971 = vmatprep.subr.bf16.mxu0 0
    %1972 = vmatpush1.bf16.msra.mxu0 %v1920
    %1973 = vmatprep.subr.bf16.mxu0 0
    %1974 = vmatpush1.bf16.msra.mxu0 %v1921
    %1975 = vmatprep.subr.bf16.mxu0 0
    %1976 = vmatpush1.bf16.msra.mxu0 %v1922
    %1977 = vmatprep.subr.bf16.mxu0 0
    %1978 = vmatpush1.bf16.msra.mxu0 %v1923
    %1979 = vmatprep.subr.bf16.mxu0 0
    %1980 = vmatpush1.bf16.msra.mxu0 %v1924
    %1981 = vmatprep.subr.bf16.mxu0 0
    %1982 = vmatpush1.bf16.msra.mxu0 %v1925
    %1983 = vmatprep.subr.bf16.mxu0 0
    %1984 = vmatpush1.bf16.msra.mxu0 %v1926
    %1985 = vmatprep.subr.bf16.mxu0 0
    %1986 = vmatpush1.bf16.msra.mxu0 %v1927
    %1987 = vmatprep.subr.bf16.mxu0 0
    %1988 = vmatpush1.bf16.msra.mxu0 %v1928
    %1989 = vmatprep.subr.bf16.mxu0 0
    %1990 = vmatpush1.bf16.msra.mxu0 %v1929
    %1991 = vmatprep.subr.bf16.mxu0 0
    %1992 = vmatpush1.bf16.msra.mxu0 %v1930
    %1993 = vmatprep.subr.bf16.mxu0 0
    %1994 = vmatpush1.bf16.msra.mxu0 %v1931
    %1995 = vmatprep.subr.bf16.mxu0 0
    %1996 = vmatpush1.bf16.msra.mxu0 %v1932
    %1997 = vmatprep.mubr.bf16.mxu0 %v1762
    %1998 = vmatmul.mubr.bf16.gmra.mrb[0].mxu0 %v1761
    %v1999 = vpop.f32.mrb[0].mxu0
    %v2000 = vadd.f32 %v1819, %v1999
    %v2001 = vpop.f32.mrb[0].mxu0
    %v2002 = vpop.f32.mrb[0].mxu0
    %v2003 = vpop.f32.mrb[0].mxu0
    %2004 = vdwg.mxu0
    %2005 = vmatprep.subr.bf16.mxu0 0
    %2006 = vmatpush1.bf16.msra.mxu0 %v1933
    %2007 = vmatprep.subr.bf16.mxu0 0
    %2008 = vmatpush1.bf16.msra.mxu0 %v1934
    %2009 = vmatprep.subr.bf16.mxu0 0
    %2010 = vmatpush1.bf16.msra.mxu0 %v1935
    %2011 = vmatprep.subr.bf16.mxu0 0
    %2012 = vmatpush1.bf16.msra.mxu0 %v1936
    %2013 = vmatprep.subr.bf16.mxu0 0
    %2014 = vmatpush1.bf16.msra.mxu0 %v1937
    %2015 = vmatprep.subr.bf16.mxu0 0
    %2016 = vmatpush1.bf16.msra.mxu0 %v1938
    %2017 = vmatprep.subr.bf16.mxu0 0
    %2018 = vmatpush1.bf16.msra.mxu0 %v1939
    %2019 = vmatprep.subr.bf16.mxu0 0
    %2020 = vmatpush1.bf16.msra.mxu0 %v1940
    %2021 = vmatprep.subr.bf16.mxu0 0
    %2022 = vmatpush1.bf16.msra.mxu0 0
    %2023 = vmatprep.subr.bf16.mxu0 0
    %2024 = vmatpush1.bf16.msra.mxu0 0
    %2025 = vmatprep.subr.bf16.mxu0 0
    %2026 = vmatpush1.bf16.msra.mxu0 0
    %2027 = vmatprep.subr.bf16.mxu0 0
    %2028 = vmatpush1.bf16.msra.mxu0 0
    %2029 = vmatprep.subr.bf16.mxu0 0
    %2030 = vmatpush1.bf16.msra.mxu0 0
    %2031 = vmatprep.subr.bf16.mxu0 0
    %2032 = vmatpush1.bf16.msra.mxu0 0
    %2033 = vmatprep.subr.bf16.mxu0 0
    %2034 = vmatpush1.bf16.msra.mxu0 0
    %2035 = vmatprep.subr.bf16.mxu0 0
    %2036 = vmatpush1.bf16.msra.mxu0 0
    %2037 = vmatprep.mubr.bf16.mxu0 0
    %2038 = vmatmul.mubr.bf16.gmra.mrb[0].mxu0 %v1763
    %v2039 = vpop.f32.mrb[0].mxu0
    %v2040 = vadd.f32 %v2000, %v2039
    %v2041 = vpop.f32.mrb[0].mxu0
    %v2042 = vpop.f32.mrb[0].mxu0
    %v2043 = vpop.f32.mrb[0].mxu0
    %2044 = vdwg.mxu0
    %v2045 = vmax.f32 %v2040, 0.0
    %2046 = vst [vmem:[#allocation2 + $0x1] sm:$0xff] %v2045
    %v2047 = vld [vmem:[#allocation2 + $0x1] sm:$0xff]
    %v2048 = vld [vmem:[#allocation2] sm:$0xff]
    %v2049 = vsel %vm1758, 0.0, %v2048
    %vm2050 = vcmp.eq.s32.totalorder %v1754, 3
    %v2051 = vld [vmem:[#allocation2 + $0x2] sm:$0xff]
    %v2052 = vsel %vm2050, 0.0, %v2051
    %v2053 = vpack.c.bf16 %v2049, %v2049
    %v2054 = vpack.c.bf16 %v2047, %v2047
    %v2055 = vpack.c.bf16 %v2052, %v2052
    %s2056 = scalar_lea.vmem [#allocation4], 1152
    %v2057 = vld [vmem:[%s2056] sm:$0xf]
    %v2058 = vld [vmem:[%s2056 + $0x4] sm:$0xf]
    %v2059 = vld [vmem:[%s2056 + $0x8] sm:$0xf]
    %v2060 = vld [vmem:[%s2056 + $0xc] sm:$0xf]
    %v2061 = vld [vmem:[%s2056 + $0x10] sm:$0xf]
    %v2062 = vld [vmem:[%s2056 + $0x14] sm:$0xf]
    %v2063 = vld [vmem:[%s2056 + $0x18] sm:$0xf]
    %v2064 = vld [vmem:[%s2056 + $0x1c] sm:$0xf]
    %v2065 = vld [vmem:[%s2056 + $0x20] sm:$0xf]
    %v2066 = vld [vmem:[%s2056 + $0x24] sm:$0xf]
    %v2067 = vld [vmem:[%s2056 + $0x28] sm:$0xf]
    %v2068 = vld [vmem:[%s2056 + $0x2c] sm:$0xf]
    %v2069 = vld [vmem:[%s2056 + $0x30] sm:$0xf]
    %v2070 = vld [vmem:[%s2056 + $0x34] sm:$0xf]
    %v2071 = vld [vmem:[%s2056 + $0x38] sm:$0xf]
    %v2072 = vld [vmem:[%s2056 + $0x3c] sm:$0xf]
    %v2073 = vld [vmem:[%s2056 + $0x40] sm:$0xf]
    %v2074 = vld [vmem:[%s2056 + $0x44] sm:$0xf]
    %v2075 = vld [vmem:[%s2056 + $0x48] sm:$0xf]
    %v2076 = vld [vmem:[%s2056 + $0x4c] sm:$0xf]
    %v2077 = vld [vmem:[%s2056 + $0x50] sm:$0xf]
    %v2078 = vld [vmem:[%s2056 + $0x54] sm:$0xf]
    %v2079 = vld [vmem:[%s2056 + $0x58] sm:$0xf]
    %v2080 = vld [vmem:[%s2056 + $0x5c] sm:$0xf]
    %v2081 = vld [vmem:[%s2056 + $0x60] sm:$0xf]
    %v2082 = vld [vmem:[%s2056 + $0x64] sm:$0xf]
    %v2083 = vld [vmem:[%s2056 + $0x68] sm:$0xf]
    %v2084 = vld [vmem:[%s2056 + $0x6c] sm:$0xf]
    %v2085 = vld [vmem:[%s2056 + $0x70] sm:$0xf]
    %v2086 = vld [vmem:[%s2056 + $0x74] sm:$0xf]
    %v2087 = vld [vmem:[%s2056 + $0x78] sm:$0xf]
    %v2088 = vld [vmem:[%s2056 + $0x7c] sm:$0xf]
    %v2089 = vld [vmem:[%s2056 + $0x80] sm:$0xf]
    %v2090 = vld [vmem:[%s2056 + $0x84] sm:$0xf]
    %v2091 = vld [vmem:[%s2056 + $0x88] sm:$0xf]
    %v2092 = vld [vmem:[%s2056 + $0x8c] sm:$0xf]
    %v2093 = vld [vmem:[%s2056 + $0x90] sm:$0xf]
    %v2094 = vld [vmem:[%s2056 + $0x94] sm:$0xf]
    %v2095 = vld [vmem:[%s2056 + $0x98] sm:$0xf]
    %v2096 = vld [vmem:[%s2056 + $0x9c] sm:$0xf]
    %v2097 = vld [vmem:[%s2056 + $0xa0] sm:$0xf]
    %v2098 = vld [vmem:[%s2056 + $0xa4] sm:$0xf]
    %v2099 = vld [vmem:[%s2056 + $0xa8] sm:$0xf]
    %v2100 = vld [vmem:[%s2056 + $0xac] sm:$0xf]
    %v2101 = vld [vmem:[%s2056 + $0xb0] sm:$0xf]
    %v2102 = vld [vmem:[%s2056 + $0xb4] sm:$0xf]
    %v2103 = vld [vmem:[%s2056 + $0xb8] sm:$0xf]
    %v2104 = vld [vmem:[%s2056 + $0xbc] sm:$0xf]
    %s2105 = scalar_lea.vmem %s2, 6
    %v2106 = vld [vmem:[%s2105] sm:$0x1]
    %v2108 = vlaneseq
    %v2109 = vshrl.u32 %v2108, 7
    %v2110 = vsub.s32 0, %v2109
    %v2111 = vrot.slane %v2106, %v2110
    %v2161 = vunpack.c.l.b16 %v2057
    %v2162 = vunpack.c.l.b16 %v2058
    %v2163 = vunpack.c.l.b16 %v2059
    %v2164 = vunpack.c.l.b16 %v2060
    %v2165 = vunpack.c.l.b16 %v2061
    %v2166 = vunpack.c.l.b16 %v2062
    %v2167 = vunpack.c.l.b16 %v2063
    %v2168 = vunpack.c.l.b16 %v2064
    %v2169 = vunpack.c.l.b16 %v2065
    %v2170 = vunpack.c.l.b16 %v2066
    %v2171 = vunpack.c.l.b16 %v2067
    %v2172 = vunpack.c.l.b16 %v2068
    %v2173 = vunpack.c.l.b16 %v2069
    %v2174 = vunpack.c.l.b16 %v2070
    %v2175 = vunpack.c.l.b16 %v2071
    %v2176 = vunpack.c.l.b16 %v2072
    %v2177 = vunpack.c.l.b16 %v2073
    %v2178 = vunpack.c.l.b16 %v2074
    %v2179 = vunpack.c.l.b16 %v2075
    %v2180 = vunpack.c.l.b16 %v2076
    %v2181 = vunpack.c.l.b16 %v2077
    %v2182 = vunpack.c.l.b16 %v2078
    %v2183 = vunpack.c.l.b16 %v2079
    %v2184 = vunpack.c.l.b16 %v2080
    %v2185 = vunpack.c.l.b16 %v2081
    %v2186 = vunpack.c.l.b16 %v2082
    %v2187 = vunpack.c.l.b16 %v2083
    %v2188 = vunpack.c.l.b16 %v2084
    %v2189 = vunpack.c.l.b16 %v2085
    %v2190 = vunpack.c.l.b16 %v2086
    %v2191 = vunpack.c.l.b16 %v2087
    %v2192 = vunpack.c.l.b16 %v2088
    %v2193 = vunpack.c.l.b16 %v2089
    %v2194 = vunpack.c.l.b16 %v2090
    %v2195 = vunpack.c.l.b16 %v2091
    %v2196 = vunpack.c.l.b16 %v2092
    %v2197 = vunpack.c.l.b16 %v2093
    %v2198 = vunpack.c.l.b16 %v2094
    %v2199 = vunpack.c.l.b16 %v2095
    %v2200 = vunpack.c.l.b16 %v2096
    %v2201 = vunpack.c.l.b16 %v2097
    %v2202 = vunpack.c.l.b16 %v2098
    %v2203 = vunpack.c.l.b16 %v2099
    %v2204 = vunpack.c.l.b16 %v2100
    %v2205 = vunpack.c.l.b16 %v2101
    %v2206 = vunpack.c.l.b16 %v2102
    %v2207 = vunpack.c.l.b16 %v2103
    %v2208 = vunpack.c.l.b16 %v2104
    %v2209 = vpack.c.b16 %v2162, %v2161
    %v2210 = vpack.c.b16 %v2164, %v2163
    %v2211 = vpack.c.b16 %v2166, %v2165
    %v2212 = vpack.c.b16 %v2168, %v2167
    %v2213 = vpack.c.b16 %v2170, %v2169
    %v2214 = vpack.c.b16 %v2172, %v2171
    %v2215 = vpack.c.b16 %v2174, %v2173
    %v2216 = vpack.c.b16 %v2176, %v2175
    %v2217 = vpack.c.b16 %v2178, %v2177
    %v2218 = vpack.c.b16 %v2180, %v2179
    %v2219 = vpack.c.b16 %v2182, %v2181
    %v2220 = vpack.c.b16 %v2184, %v2183
    %v2221 = vpack.c.b16 %v2186, %v2185
    %v2222 = vpack.c.b16 %v2188, %v2187
    %v2223 = vpack.c.b16 %v2190, %v2189
    %v2224 = vpack.c.b16 %v2192, %v2191
    %v2225 = vpack.c.b16 %v2194, %v2193
    %v2226 = vpack.c.b16 %v2196, %v2195
    %v2227 = vpack.c.b16 %v2198, %v2197
    %v2228 = vpack.c.b16 %v2200, %v2199
    %v2229 = vpack.c.b16 %v2202, %v2201
    %v2230 = vpack.c.b16 %v2204, %v2203
    %v2231 = vpack.c.b16 %v2206, %v2205
    %v2232 = vpack.c.b16 %v2208, %v2207
    %2257 = vmatprep.subr.bf16.mxu0 0
    %2258 = vmatpush1.bf16.msra.mxu0 %v2209
    %2259 = vmatprep.subr.bf16.mxu0 0
    %2260 = vmatpush1.bf16.msra.mxu0 %v2210
    %2261 = vmatprep.subr.bf16.mxu0 0
    %2262 = vmatpush1.bf16.msra.mxu0 %v2211
    %2263 = vmatprep.subr.bf16.mxu0 0
    %2264 = vmatpush1.bf16.msra.mxu0 %v2212
    %2265 = vmatprep.subr.bf16.mxu0 0
    %2266 = vmatpush1.bf16.msra.mxu0 %v2213
    %2267 = vmatprep.subr.bf16.mxu0 0
    %2268 = vmatpush1.bf16.msra.mxu0 %v2214
    %2269 = vmatprep.subr.bf16.mxu0 0
    %2270 = vmatpush1.bf16.msra.mxu0 %v2215
    %2271 = vmatprep.subr.bf16.mxu0 0
    %2272 = vmatpush1.bf16.msra.mxu0 %v2216
    %2273 = vmatprep.subr.bf16.mxu0 0
    %2274 = vmatpush1.bf16.msra.mxu0 %v2217
    %2275 = vmatprep.subr.bf16.mxu0 0
    %2276 = vmatpush1.bf16.msra.mxu0 %v2218
    %2277 = vmatprep.subr.bf16.mxu0 0
    %2278 = vmatpush1.bf16.msra.mxu0 %v2219
    %2279 = vmatprep.subr.bf16.mxu0 0
    %2280 = vmatpush1.bf16.msra.mxu0 %v2220
    %2281 = vmatprep.subr.bf16.mxu0 0
    %2282 = vmatpush1.bf16.msra.mxu0 %v2221
    %2283 = vmatprep.subr.bf16.mxu0 0
    %2284 = vmatpush1.bf16.msra.mxu0 %v2222
    %2285 = vmatprep.subr.bf16.mxu0 0
    %2286 = vmatpush1.bf16.msra.mxu0 %v2223
    %2287 = vmatprep.subr.bf16.mxu0 0
    %2288 = vmatpush1.bf16.msra.mxu0 %v2224
    %2289 = vmatprep.mubr.bf16.mxu0 %v2054
    %2290 = vmatmul.mubr.bf16.gmra.mrb[0].mxu0 %v2053
    %v2291 = vpop.f32.mrb[0].mxu0
    %v2292 = vadd.f32 %v2111, %v2291
    %v2293 = vpop.f32.mrb[0].mxu0
    %v2294 = vpop.f32.mrb[0].mxu0
    %v2295 = vpop.f32.mrb[0].mxu0
    %2296 = vdwg.mxu0
    %2297 = vmatprep.subr.bf16.mxu0 0
    %2298 = vmatpush1.bf16.msra.mxu0 %v2225
    %2299 = vmatprep.subr.bf16.mxu0 0
    %2300 = vmatpush1.bf16.msra.mxu0 %v2226
    %2301 = vmatprep.subr.bf16.mxu0 0
    %2302 = vmatpush1.bf16.msra.mxu0 %v2227
    %2303 = vmatprep.subr.bf16.mxu0 0
    %2304 = vmatpush1.bf16.msra.mxu0 %v2228
    %2305 = vmatprep.subr.bf16.mxu0 0
    %2306 = vmatpush1.bf16.msra.mxu0 %v2229
    %2307 = vmatprep.subr.bf16.mxu0 0
    %2308 = vmatpush1.bf16.msra.mxu0 %v2230
    %2309 = vmatprep.subr.bf16.mxu0 0
    %2310 = vmatpush1.bf16.msra.mxu0 %v2231
    %2311 = vmatprep.subr.bf16.mxu0 0
    %2312 = vmatpush1.bf16.msra.mxu0 %v2232
    %2313 = vmatprep.subr.bf16.mxu0 0
    %2314 = vmatpush1.bf16.msra.mxu0 0
    %2315 = vmatprep.subr.bf16.mxu0 0
    %2316 = vmatpush1.bf16.msra.mxu0 0
    %2317 = vmatprep.subr.bf16.mxu0 0
    %2318 = vmatpush1.bf16.msra.mxu0 0
    %2319 = vmatprep.subr.bf16.mxu0 0
    %2320 = vmatpush1.bf16.msra.mxu0 0
    %2321 = vmatprep.subr.bf16.mxu0 0
    %2322 = vmatpush1.bf16.msra.mxu0 0
    %2323 = vmatprep.subr.bf16.mxu0 0
    %2324 = vmatpush1.bf16.msra.mxu0 0
    %2325 = vmatprep.subr.bf16.mxu0 0
    %2326 = vmatpush1.bf16.msra.mxu0 0
    %2327 = vmatprep.subr.bf16.mxu0 0
    %2328 = vmatpush1.bf16.msra.mxu0 0
    %2329 = vmatprep.mubr.bf16.mxu0 0
    %2330 = vmatmul.mubr.bf16.gmra.mrb[0].mxu0 %v2055
    %v2331 = vpop.f32.mrb[0].mxu0
    %v2332 = vadd.f32 %v2292, %v2331
    %v2333 = vpop.f32.mrb[0].mxu0
    %v2334 = vpop.f32.mrb[0].mxu0
    %v2335 = vpop.f32.mrb[0].mxu0
    %2336 = vdwg.mxu0
    %v2337 = vmax.f32 %v2332, 0.0
    %2338 = vst [vmem:[#allocation3 + $0x1] sm:$0xff] %v2337
    %v2339 = vld [vmem:[%s1136] ss:$4 sm:$0x3]
    %v2340 = vld [vmem:[%s1756] ss:$4 sm:$0x3]
    %v2341 = vadd.f32 %v2339, %v2340
    %s2342 = scalar_lea.vmem [#allocation3], 3
    %v2343 = vld [vmem:[%s2342] ss:$4 sm:$0x3]
    %v2344 = vadd.f32 %v2341, %v2343
    %s2345 = scalar_lea.vmem [#allocation3], 4
    %v2346 = vld [vmem:[%s2345] ss:$4 sm:$0x3]
    %v2347 = vadd.f32 %v2344, %v2346
    %v2348 = vpack.c.bf16 %v2347, %v2347
    %v2349 = vld [vmem:[%s3] sm:$0xf]
    %v2350 = vld [vmem:[%s3 + $0x4] sm:$0xf]
    %v2351 = vld [vmem:[%s3 + $0x8] sm:$0xf]
    %v2352 = vld [vmem:[%s3 + $0xc] sm:$0xf]
    %v2353 = vld [vmem:[%s3 + $0x10] sm:$0xf]
    %v2354 = vld [vmem:[%s3 + $0x14] sm:$0xf]
    %v2355 = vld [vmem:[%s3 + $0x18] sm:$0xf]
    %v2356 = vld [vmem:[%s3 + $0x1c] sm:$0xf]
    %v2357 = vld [vmem:[%s3 + $0x20] sm:$0xf]
    %v2358 = vld [vmem:[%s3 + $0x24] sm:$0xf]
    %v2359 = vld [vmem:[%s3 + $0x28] sm:$0xf]
    %v2360 = vld [vmem:[%s3 + $0x2c] sm:$0xf]
    %v2361 = vld [vmem:[%s3 + $0x30] sm:$0xf]
    %v2362 = vld [vmem:[%s3 + $0x34] sm:$0xf]
    %v2363 = vld [vmem:[%s3 + $0x38] sm:$0xf]
    %v2364 = vld [vmem:[%s3 + $0x3c] sm:$0xf]
    %v2365 = vld [vmem:[%s4] sm:$0x1]
    %v2367 = vlaneseq
    %v2368 = vshrl.u32 %v2367, 7
    %v2369 = vsub.s32 0, %v2368
    %v2370 = vrot.slane %v2365, %v2369
    %v2388 = vunpack.c.l.b16 %v2349
    %v2389 = vunpack.c.l.b16 %v2350
    %v2390 = vunpack.c.l.b16 %v2351
    %v2391 = vunpack.c.l.b16 %v2352
    %v2392 = vunpack.c.l.b16 %v2353
    %v2393 = vunpack.c.l.b16 %v2354
    %v2394 = vunpack.c.l.b16 %v2355
    %v2395 = vunpack.c.l.b16 %v2356
    %v2396 = vunpack.c.l.b16 %v2357
    %v2397 = vunpack.c.l.b16 %v2358
    %v2398 = vunpack.c.l.b16 %v2359
    %v2399 = vunpack.c.l.b16 %v2360
    %v2400 = vunpack.c.l.b16 %v2361
    %v2401 = vunpack.c.l.b16 %v2362
    %v2402 = vunpack.c.l.b16 %v2363
    %v2403 = vunpack.c.l.b16 %v2364
    %v2404 = vpack.c.b16 %v2389, %v2388
    %v2405 = vpack.c.b16 %v2391, %v2390
    %v2406 = vpack.c.b16 %v2393, %v2392
    %v2407 = vpack.c.b16 %v2395, %v2394
    %v2408 = vpack.c.b16 %v2397, %v2396
    %v2409 = vpack.c.b16 %v2399, %v2398
    %v2410 = vpack.c.b16 %v2401, %v2400
    %v2411 = vpack.c.b16 %v2403, %v2402
    %2420 = vmatprep.subr.bf16.mxu0 0
    %2421 = vmatpush1.bf16.msra.mxu0 %v2404
    %2422 = vmatprep.subr.bf16.mxu0 0
    %2423 = vmatpush1.bf16.msra.mxu0 %v2405
    %2424 = vmatprep.subr.bf16.mxu0 0
    %2425 = vmatpush1.bf16.msra.mxu0 %v2406
    %2426 = vmatprep.subr.bf16.mxu0 0
    %2427 = vmatpush1.bf16.msra.mxu0 %v2407
    %2428 = vmatprep.subr.bf16.mxu0 0
    %2429 = vmatpush1.bf16.msra.mxu0 %v2408
    %2430 = vmatprep.subr.bf16.mxu0 0
    %2431 = vmatpush1.bf16.msra.mxu0 %v2409
    %2432 = vmatprep.subr.bf16.mxu0 0
    %2433 = vmatpush1.bf16.msra.mxu0 %v2410
    %2434 = vmatprep.subr.bf16.mxu0 0
    %2435 = vmatpush1.bf16.msra.mxu0 %v2411
    %2436 = vmatprep.subr.bf16.mxu0 0
    %2437 = vmatpush1.bf16.msra.mxu0 0
    %2438 = vmatprep.subr.bf16.mxu0 0
    %2439 = vmatpush1.bf16.msra.mxu0 0
    %2440 = vmatprep.subr.bf16.mxu0 0
    %2441 = vmatpush1.bf16.msra.mxu0 0
    %2442 = vmatprep.subr.bf16.mxu0 0
    %2443 = vmatpush1.bf16.msra.mxu0 0
    %2444 = vmatprep.subr.bf16.mxu0 0
    %2445 = vmatpush1.bf16.msra.mxu0 0
    %2446 = vmatprep.subr.bf16.mxu0 0
    %2447 = vmatpush1.bf16.msra.mxu0 0
    %2448 = vmatprep.subr.bf16.mxu0 0
    %2449 = vmatpush1.bf16.msra.mxu0 0
    %2450 = vmatprep.subr.bf16.mxu0 0
    %2451 = vmatpush1.bf16.msra.mxu0 0
    %2452 = vmatprep.mubr.bf16.mxu0 0
    %2453 = vmatmul.mubr.bf16.gmra.mrb[0].mxu0 %v2348
    %v2454 = vpop.f32.mrb[0].mxu0
    %v2455 = vadd.f32 %v2370, %v2454
    %v2456 = vpop.f32.mrb[0].mxu0
    %v2457 = vpop.f32.mrb[0].mxu0
    %v2458 = vpop.f32.mrb[0].mxu0
    %2459 = vdwg.mxu0
    %2460 = vst [vmem:[#allocation7] sm:$0x3] %v2455
    // Predicated region
    $region26: #{forward.1} parent=1 // pred_check
      _
    $region27: #{forward.1} parent=1 // pred_check_branch
      %2462 = sbr.rel (0) target = $region29
    $region28: #{forward.1} parent=1 // pred_region
      %s2464 = ssub.s32 32, 32
      %2465 = vsyncadd [#allocation6], %s2464
      %s2467 = sshll.u32 [#allocation7], 4
      %s2468 = int_to_ptr.vmem [resolvable:$true] %s2467
      %2470 = dma.vmem_to_hbm [thread:$0]  %s2468, 32, %s5, [#allocation6]
    $region29: #{forward.1} parent=1 // pred_fallthru
      _
    // Predicated region
    $region30: #{forward.1} parent=1 // pred_check
      _
    $region31: #{forward.1} parent=1 // pred_check_branch
      %2472 = sbr.rel (0) target = $region33
    $region32: #{forward.1} parent=1 // pred_region
      %2473 = dma.done [#allocation6], 32
    $region33: #{forward.1} parent=1 // pred_fallthru
      _
    %2474 = vsyncpa [#allocation5], 1
    %2475 = vsyncpa [#allocation6], 1

</llo_original>
